<compile_context>
chip_gen: v7x
topology: tpu7x:2x2x1
jax: 0.10.0
libtpu: 0.0.40
codegen_flags: <defaults>
</compile_context>

<pallas_src>
import math

import jax
import jax.numpy as jnp
import numpy as np
from jax.experimental import pallas as pl
from jax.experimental.pallas import tpu as pltpu


FCP = 128  # lane-dense padding for all fc feature dims and the logits


# ----------------------------- layout helpers --------------------------------

def _round_up(x, m):
    return ((x + m - 1) // m) * m


def _conv_col_layout(ow_total, oc):
    """Pool-friendly, lane-dense conv-output column layout.

    Even output columns (ow = 0,2,4,...) are packed from lane 0; odd output
    columns start at lane `half` (64 when it fits), so the fused 2x2 max-pool is
    a single elementwise max of two lane-aligned windows.  Total width is padded
    to a multiple of 128 so the conv accumulators are lane-dense vregs.
    """
    ne = (ow_total + 1) // 2            # number of even output columns
    no = ow_total // 2                  # number of odd output columns
    half = 64 if (ne * oc <= 64 and 64 + no * oc <= 128) else ne * oc
    width = _round_up(max(half + no * oc, 128), 128)
    return half, width


def _parity_col(ow, oc, half):
    base = (ow // 2) * oc
    return base if ow % 2 == 0 else half + base


# ----------------------------- weight packing --------------------------------

def _expand_conv_weight(w_oihw, wp_total, ow_total, half, width, dtype):
    """(OC,Cin,KH,KW) -> (KH*WP*Cin, width) fused-im2col matmul weight.

    Row index  r = kh*WP*Cin + wp*Cin + ci   (matches the in-kernel im2col slab).
    Col index  c = parity_col(ow)*.. + oc     (pool-friendly parity layout).
    Block (kh, wp, ow) is w[:,:,kh,kw].T with kw = wp - ow when 0 <= kw < KW.
    """
    w = np.asarray(jax.device_get(w_oihw), dtype=np.float32)
    OC, Cin, KH, KW = w.shape
    SW = wp_total * Cin
    We = np.zeros((KH, SW, width), np.float32)
    for kh in range(KH):
        for kw in range(KW):
            blk = w[:, :, kh, kw].T                             # (Cin, OC)
            for ow in range(ow_total):
                wp = ow + kw                                    # 0 <= wp < WP
                c0 = _parity_col(ow, OC, half)
                We[kh, wp * Cin:(wp + 1) * Cin, c0:c0 + OC] = blk
    return jnp.asarray(We.reshape(KH * SW, width), dtype=dtype)


def _tile_conv_bias(b, ow_total, half, width):
    b = np.asarray(jax.device_get(b), dtype=np.float32)
    OC = b.shape[0]
    Bt = np.zeros((1, width), np.float32)
    for ow in range(ow_total):
        c0 = _parity_col(ow, OC, half)
        Bt[0, c0:c0 + OC] = b
    return jnp.asarray(Bt)


def _pack_fc(w_torch, b_torch, dtype, row_perm=None):
    """torch (out,in) linear -> 128x128 right-multiply weight + (1,128) f32 bias."""
    w = np.asarray(jax.device_get(w_torch), dtype=np.float32)   # (out, in)
    b = np.asarray(jax.device_get(b_torch), dtype=np.float32)
    out_f, in_f = w.shape
    assert in_f <= FCP and out_f <= FCP
    wt = w.T                                                    # (in, out)
    if row_perm is not None:
        wt = wt[row_perm, :]
    Wp = np.zeros((FCP, FCP), np.float32)
    Wp[:in_f, :out_f] = wt
    Bp = np.zeros((1, FCP), np.float32)
    Bp[0, :out_f] = b
    return jnp.asarray(Wp, dtype=dtype), jnp.asarray(Bp)


# ------------------------ fused LeNet forward builder -------------------------

def make_lenet(in_chan, out_chan, imsize, kernel_size=5, tb=64, use_bf16=False):
    """Returns (pack_params, forward).

    tb:        images per grid step (batch tile).  Multiple of 8 sublanes; pick
               larger (64..256) for throughput, keep Npad/tb even on v7x so both
               TensorCores get equal work.  Working set is O(tb * 20 KB) so even
               tb=256 stays far below the 32 MiB scoped-VMEM default.
    use_bf16:  store matmul weights in bf16 and cast activations right before
               each dot (v6e/v7x MXU throughput); accumulation/bias/ReLU/pool
               math stays f32 (v5e-safe).
    """
    assert tb >= 8 and tb % 8 == 0, "tb must be a multiple of 8 sublanes"
    TB = tb
    KH = KW = kernel_size
    pad = 1
    OC1, OC2 = 6, 16
    HP1, WP1 = imsize + 2 * pad, imsize + 2 * pad
    OH1, OW1 = HP1 - KH + 1, WP1 - KW + 1          # conv1 output
    PH1, PW1 = OH1 // 2, OW1 // 2                  # pool1 output (floor)
    HP2, WP2 = PH1 + 2 * pad, PW1 + 2 * pad        # padded conv2 input
    OH2, OW2 = HP2 - KH + 1, WP2 - KW + 1          # conv2 output
    PH2, PW2 = OH2 // 2, OW2 // 2                  # pool2 output (floor)
    fc1_in = OC2 * PH2 * PW2
    SWin = imsize * in_chan                        # unpadded input strip width
    SW1, SW2 = WP1 * in_chan, WP2 * OC1            # padded strip widths
    K1, K2 = KH * SW1, KH * SW2                    # fused conv contraction dims
    HALF1, W1PAD = _conv_col_layout(OW1, OC1)
    HALF2, W2PAD = _conv_col_layout(OW2, OC2)
    assert fc1_in <= FCP and out_chan <= FCP
    # sanity: matches the torch module's fc1 sizing formula
    z = int(0.5 * (0.5 * (imsize - 2) - 2))
    assert z == PH2 == PW2, (z, PH2, PW2)
    mm_dtype = jnp.bfloat16 if use_bf16 else jnp.float32

    # ------------------------------ the kernel -------------------------------
    # Activation row order everywhere is (output_row, batch): row = oh*TB + tb.
    # With TB a multiple of 8 every reshape below only regroups whole 8-sublane
    # tile rows (layout-free), every pool slice is a contiguous (TB, 128) block,
    # and every store covers TB dense sublanes.
    def kernel(x_ref, w1_ref, b1_ref, w2_ref, b2_ref,
               wf1_ref, bf1_ref, wf2_ref, bf2_ref, wf3_ref, bf3_ref,
               o_ref, x1cat_ref, x2cat_ref, fcin_ref):
        # Unconditional per-step zeroing (provides the conv zero-padding rings
        # and the fc feature padding; must NOT be program_id-gated: the grid is
        # split across TensorCores under 'parallel' semantics).
        x1cat_ref[...] = jnp.zeros_like(x1cat_ref)
        x2cat_ref[...] = jnp.zeros_like(x2cat_ref)
        fcin_ref[...] = jnp.zeros_like(fcin_ref)

        # --- conv1 im2col: scatter the (imsize, TB, W*C) input block into the
        #     zeroed, kh-expanded LHS scratch (OH1, TB, KH*SW1).  The zero rows
        #     / lanes that are never written ARE the conv zero padding.
        xv = x_ref[...]                                      # (imsize, TB, SWin) f32
        for kh in range(KH):
            lo = max(0, pad - kh)                            # valid output rows
            hi = min(OH1, imsize + pad - kh)
            x1cat_ref[lo:hi, :,
                      kh * SW1 + pad * in_chan:
                      kh * SW1 + pad * in_chan + SWin] = xv[lo - pad + kh:
                                                            hi - pad + kh, :, :]

        # --- conv1 + bias + ReLU: ONE fused matmul, batch folded into M. ---
        lhs1 = x1cat_ref[...].reshape(OH1 * TB, K1)
        y1 = jnp.dot(lhs1.astype(mm_dtype), w1_ref[...],
                     preferred_element_type=jnp.float32)
        y1 = jnp.maximum(y1 + b1_ref[...], 0.0)              # (OH1*TB, W1PAD) f32

        # --- pool1 (2x2, floor) fused with conv2's im2col scatter.  Row-pair
        #     max = max of two contiguous (TB, W1PAD) blocks; column max = two
        #     lane-aligned parity windows.  Each pooled row is written directly
        #     at every kh position of conv2's expanded LHS that needs it.
        for ph in range(PH1):
            rm = jnp.maximum(y1[(2 * ph) * TB:(2 * ph + 1) * TB, :],
                             y1[(2 * ph + 1) * TB:(2 * ph + 2) * TB, :])
            pooled = jnp.maximum(rm[:, 0:PW1 * OC1],
                                 rm[:, HALF1:HALF1 + PW1 * OC1])   # (TB, PW1*OC1)
            for kh in range(KH):
                oh2 = pad + ph - kh
                if 0 <= oh2 < OH2:
                    x2cat_ref[oh2, :,
                              kh * SW2 + pad * OC1:
                              kh * SW2 + pad * OC1 + PW1 * OC1] = pooled

        # --- conv2 + bias + ReLU (same fused single matmul). ---
        lhs2 = x2cat_ref[...].reshape(OH2 * TB, K2)
        y2 = jnp.dot(lhs2.astype(mm_dtype), w2_ref[...],
                     preferred_element_type=jnp.float32)
        y2 = jnp.maximum(y2 + b2_ref[...], 0.0)              # (OH2*TB, W2PAD) f32

        # --- pool2 -> zero-padded (TB, 128) fc1 feature rows, (h, w, c) layout
        #     (fc1 weight rows were permuted at pack time to match). ---
        for ph in range(PH2):
            rm = jnp.maximum(y2[(2 * ph) * TB:(2 * ph + 1) * TB, :],
                             y2[(2 * ph + 1) * TB:(2 * ph + 2) * TB, :])
            pooled = jnp.maximum(rm[:, 0:PW2 * OC2],
                                 rm[:, HALF2:HALF2 + PW2 * OC2])   # (TB, PW2*OC2)
            fcin_ref[:, ph * PW2 * OC2:(ph + 1) * PW2 * OC2] = pooled

        # --- fc1 -> ReLU -> fc2 -> ReLU -> (dropout identity) -> fc3,
        #     all lane-dense 128-padded MXU matmuls with M = TB. ---
        feats = fcin_ref[...]                                # (TB, 128) f32
        h = jnp.maximum(jnp.dot(feats.astype(mm_dtype), wf1_ref[...],
                                preferred_element_type=jnp.float32)
                        + bf1_ref[...], 0.0)
        h = jnp.maximum(jnp.dot(h.astype(mm_dtype), wf2_ref[...],
                                preferred_element_type=jnp.float32)
                        + bf2_ref[...], 0.0)
        # TODO(synk): nn.Dropout(p=0.5) implemented as identity (eval-mode
        # semantics); train mode would mask with pltpu.prng_seed/prng_random_bits.
        logits = jnp.dot(h.astype(mm_dtype), wf3_ref[...],
                         preferred_element_type=jnp.float32) + bf3_ref[...]
        o_ref[...] = logits                                  # (TB, 128) f32

    # --------------------------- param packing (once) ------------------------
    def pack_params(params):
        # my fc-feature order (h,w,c) -> torch flatten order (c,h,w)
        perm = np.zeros(fc1_in, np.int64)
        for h in range(PH2):
            for wq in range(PW2):
                for c in range(OC2):
                    perm[(h * PW2 + wq) * OC2 + c] = c * (PH2 * PW2) + h * PW2 + wq
        wf1, bf1 = _pack_fc(params["fc1_w"], params["fc1_b"], mm_dtype, row_perm=perm)
        wf2, bf2 = _pack_fc(params["fc2_w"], params["fc2_b"], mm_dtype)
        wf3, bf3 = _pack_fc(params["fc3_w"], params["fc3_b"], mm_dtype)
        return {
            "w1e": _expand_conv_weight(params["conv1_w"], WP1, OW1, HALF1, W1PAD, mm_dtype),
            "b1e": _tile_conv_bias(params["conv1_b"], OW1, HALF1, W1PAD),
            "w2e": _expand_conv_weight(params["conv2_w"], WP2, OW2, HALF2, W2PAD, mm_dtype),
            "b2e": _tile_conv_bias(params["conv2_b"], OW2, HALF2, W2PAD),
            "wf1": wf1, "bf1": bf1, "wf2": wf2, "bf2": bf2,
            "wf3": wf3, "bf3": bf3,
        }

    # ------------------------------- forward ----------------------------------
    @jax.jit
    def forward(packed, x_nchw):
        N = x_nchw.shape[0]
        # NCHW -> (H, Npad, W*C): batch lives in the second-to-last (sublane)
        # dim so every kernel block / store is TB-sublane dense.  No spatial
        # jnp.pad here: padding happens in-kernel via the zeroed scratches.
        xs = jnp.transpose(x_nchw, (2, 0, 3, 1)).reshape(imsize, N, SWin)
        n_extra = (-N) % TB
        if n_extra:
            xs = jnp.pad(xs, ((0, 0), (0, n_extra), (0, 0)))
        npad = N + n_extra

        const2 = lambda n: (0, 0)
        out = pl.pallas_call(
            kernel,
            out_shape=jax.ShapeDtypeStruct((npad, FCP), jnp.float32),
            grid=(npad // TB,),
            in_specs=[
                pl.BlockSpec((imsize, TB, SWin), lambda n: (0, n, 0)),
                pl.BlockSpec((K1, W1PAD), const2),
                pl.BlockSpec((1, W1PAD), const2),
                pl.BlockSpec((K2, W2PAD), const2),
                pl.BlockSpec((1, W2PAD), const2),
                pl.BlockSpec((FCP, FCP), const2),
                pl.BlockSpec((1, FCP), const2),
                pl.BlockSpec((FCP, FCP), const2),
                pl.BlockSpec((1, FCP), const2),
                pl.BlockSpec((FCP, FCP), const2),
                pl.BlockSpec((1, FCP), const2),
            ],
            out_specs=pl.BlockSpec((TB, FCP), lambda n: (n, 0)),
            scratch_shapes=[
                pltpu.VMEM((OH1, TB, K1), jnp.float32),   # conv1 fused-im2col LHS
                pltpu.VMEM((OH2, TB, K2), jnp.float32),   # conv2 fused-im2col LHS
                pltpu.VMEM((TB, FCP), jnp.float32),       # zero-padded fc1 features
            ],
            compiler_params=pltpu.CompilerParams(
                dimension_semantics=("parallel",)),       # megacore over batch tiles
        )(xs, packed["w1e"], packed["b1e"], packed["w2e"], packed["b2e"],
          packed["wf1"], packed["bf1"], packed["wf2"], packed["bf2"],
          packed["wf3"], packed["bf3"])
        return out[:N, :out_chan]

    return pack_params, forward


# ------------------------------- parameters -----------------------------------

def init_params(key, in_chan, out_chan, imsize, kernel_size=5):
    z = 0.5 * (imsize - 2)
    z = int(0.5 * (z - 2))
    fc1_in = 16 * z * z
    ks = jax.random.split(key, 8)

    def conv_init(kw, kb, oc, ic, k):
        fan_in = ic * k * k
        bound = 1.0 / math.sqrt(fan_in)
        w = jax.random.uniform(kw, (oc, ic, k, k), jnp.float32, -bound, bound)
        b = jax.random.uniform(kb, (oc,), jnp.float32, -bound, bound)
        return w, b

    def linear_init(kw, out_f, in_f):
        # matches nn.init.uniform_(-sqrt(3/in), sqrt(3/in)), bias = 0
        bound = math.sqrt(3.0 / in_f)
        w = jax.random.uniform(kw, (out_f, in_f), jnp.float32, -bound, bound)
        b = jnp.zeros((out_f,), jnp.float32)
        return w, b

    p = {}
    p["conv1_w"], p["conv1_b"] = conv_init(ks[0], ks[1], 6, in_chan, kernel_size)
    p["conv2_w"], p["conv2_b"] = conv_init(ks[2], ks[3], 16, 6, kernel_size)
    p["fc1_w"], p["fc1_b"] = linear_init(ks[4], 120, fc1_in)
    p["fc2_w"], p["fc2_b"] = linear_init(ks[5], 84, 120)
    p["fc3_w"], p["fc3_b"] = linear_init(ks[6], out_chan, 84)
    return p


# ------------------------------ pure-JAX reference -----------------------------

def lenet_reference(params, x_nchw):
    def conv(x, w, b):
        y = jax.lax.conv_general_dilated(
            x, w, (1, 1), [(1, 1), (1, 1)],
            dimension_numbers=("NCHW", "OIHW", "NCHW"))
        return jax.nn.relu(y + b[None, :, None, None])

    def pool(x):
        return jax.lax.reduce_window(x, -jnp.inf, jax.lax.max,
                                     (1, 1, 2, 2), (1, 1, 2, 2), "VALID")

    x = pool(conv(x_nchw, params["conv1_w"], params["conv1_b"]))
    x = pool(conv(x, params["conv2_w"], params["conv2_b"]))
    x = x.reshape(x.shape[0], -1)
    x = jax.nn.relu(x @ params["fc1_w"].T + params["fc1_b"])
    x = jax.nn.relu(x @ params["fc2_w"].T + params["fc2_b"])
    x = x @ params["fc3_w"].T + params["fc3_b"]
    return x


if __name__ == "__main__":
    in_chan, out_chan, imsize = 3, 10, 16
    batch = 20                               # deliberately NOT a multiple of tb
    key = jax.random.PRNGKey(0)
    kx, kp = jax.random.split(key)
    params = init_params(kp, in_chan, out_chan, imsize)
    x = jax.random.normal(kx, (batch, in_chan, imsize, imsize), jnp.float32)

    ref = jax.block_until_ready(lenet_reference(params, x))

    # f32-matmul path: tight reference check (multi-step grid + batch padding).
    pack_params, forward = make_lenet(in_chan, out_chan, imsize, tb=8)
    out = jax.block_until_ready(forward(pack_params(params), x))
    assert out.shape == (batch, out_chan), out.shape
    assert jnp.allclose(out, ref, rtol=1e-3, atol=1e-3), (
        f"f32 path max abs diff {float(jnp.max(jnp.abs(out - ref)))}")

    # bf16-matmul-operand path (the v6e/v7x throughput configuration): same
    # kernel structure, looser tolerance for bf16 operand rounding.
    pack16, forward16 = make_lenet(in_chan, out_chan, imsize, tb=8, use_bf16=True)
    out16 = jax.block_until_ready(forward16(pack16(params), x))
    assert out16.shape == (batch, out_chan), out16.shape
    assert jnp.allclose(out16, ref, rtol=5e-2, atol=5e-2), (
        f"bf16 path max abs diff {float(jnp.max(jnp.abs(out16 - ref)))}")

    print("KERNEL_OK")
</pallas_src>

<mosaic_0001>
module attributes {stable_mosaic.version = 11 : i64} {
  func.func @kernel(%arg0: i32, %arg1: memref<16x8x48xf32, #tpu.memory_space<vmem>>, %arg2: memref<270x128xf32, #tpu.memory_space<vmem>>, %arg3: memref<1x128xf32, #tpu.memory_space<vmem>>, %arg4: memref<270x128xf32, #tpu.memory_space<vmem>>, %arg5: memref<1x128xf32, #tpu.memory_space<vmem>>, %arg6: memref<128x128xf32, #tpu.memory_space<vmem>>, %arg7: memref<1x128xf32, #tpu.memory_space<vmem>>, %arg8: memref<128x128xf32, #tpu.memory_space<vmem>>, %arg9: memref<1x128xf32, #tpu.memory_space<vmem>>, %arg10: memref<128x128xf32, #tpu.memory_space<vmem>>, %arg11: memref<1x128xf32, #tpu.memory_space<vmem>>, %arg12: memref<8x128xf32, #tpu.memory_space<vmem>>, %arg13: memref<14x8x270xf32, #tpu.memory_space<vmem>>, %arg14: memref<5x8x270xf32, #tpu.memory_space<vmem>>, %arg15: memref<8x128xf32, #tpu.memory_space<vmem>>) attributes {dimension_semantics = [#tpu.dimension_semantics<parallel>], iteration_bounds = array<i64: 3>, scalar_prefetch = 0 : i64, scratch_operands = 3 : i64, tpu.core_type = #tpu.core_type<tc>, window_params = [{transform_indices = @transform_0, window_bounds = array<i64: 16, 8, 48>}, {pipeline_mode = #tpu.pipeline_mode<synchronous>, transform_indices = @transform_1, window_bounds = array<i64: 270, 128>}, {pipeline_mode = #tpu.pipeline_mode<synchronous>, transform_indices = @transform_2, window_bounds = array<i64: 1, 128>}, {pipeline_mode = #tpu.pipeline_mode<synchronous>, transform_indices = @transform_3, window_bounds = array<i64: 270, 128>}, {pipeline_mode = #tpu.pipeline_mode<synchronous>, transform_indices = @transform_4, window_bounds = array<i64: 1, 128>}, {pipeline_mode = #tpu.pipeline_mode<synchronous>, transform_indices = @transform_5, window_bounds = array<i64: 128, 128>}, {pipeline_mode = #tpu.pipeline_mode<synchronous>, transform_indices = @transform_6, window_bounds = array<i64: 1, 128>}, {pipeline_mode = #tpu.pipeline_mode<synchronous>, transform_indices = @transform_7, window_bounds = array<i64: 128, 128>}, {pipeline_mode = #tpu.pipeline_mode<synchronous>, transform_indices = @transform_8, window_bounds = array<i64: 1, 128>}, {pipeline_mode = #tpu.pipeline_mode<synchronous>, transform_indices = @transform_9, window_bounds = array<i64: 128, 128>}, {pipeline_mode = #tpu.pipeline_mode<synchronous>, transform_indices = @transform_10, window_bounds = array<i64: 1, 128>}, {transform_indices = @transform_11, window_bounds = array<i64: 8, 128>}]} {
    %cst = arith.constant 0.000000e+00 : f32
    %0 = vector.broadcast %cst : f32 to vector<14x8x270xf32>
    %c0 = arith.constant 0 : index
    %c0_0 = arith.constant 0 : index
    %c0_1 = arith.constant 0 : index
    %1 = vector.load %arg13[%c0, %c0_0, %c0_1] : memref<14x8x270xf32, #tpu.memory_space<vmem>>, vector<14x8x270xf32>
    tpu.vector_store %arg13[%c0, %c0_0, %c0_1], %0 {strides = array<i32>} : memref<14x8x270xf32, #tpu.memory_space<vmem>>, vector<14x8x270xf32>,
    %cst_2 = arith.constant 0.000000e+00 : f32
    %2 = vector.broadcast %cst_2 : f32 to vector<5x8x270xf32>
    %c0_3 = arith.constant 0 : index
    %c0_4 = arith.constant 0 : index
    %c0_5 = arith.constant 0 : index
    %3 = vector.load %arg14[%c0_3, %c0_4, %c0_5] : memref<5x8x270xf32, #tpu.memory_space<vmem>>, vector<5x8x270xf32>
    tpu.vector_store %arg14[%c0_3, %c0_4, %c0_5], %2 {strides = array<i32>} : memref<5x8x270xf32, #tpu.memory_space<vmem>>, vector<5x8x270xf32>,
    %cst_6 = arith.constant 0.000000e+00 : f32
    %4 = vector.broadcast %cst_6 : f32 to vector<8x128xf32>
    %c0_7 = arith.constant 0 : index
    %c0_8 = arith.constant 0 : index
    %5 = vector.load %arg15[%c0_7, %c0_8] : memref<8x128xf32, #tpu.memory_space<vmem>>, vector<8x128xf32>
    tpu.vector_store %arg15[%c0_7, %c0_8], %4 {strides = array<i32>} : memref<8x128xf32, #tpu.memory_space<vmem>>, vector<8x128xf32>,
    %c0_9 = arith.constant 0 : index
    %c0_10 = arith.constant 0 : index
    %c0_11 = arith.constant 0 : index
    %6 = vector.load %arg1[%c0_9, %c0_10, %c0_11] : memref<16x8x48xf32, #tpu.memory_space<vmem>>, vector<16x8x48xf32>
    %7 = vector.extract_strided_slice %6 {offsets = [0, 0, 0], sizes = [13, 8, 48], strides = [1, 1, 1]} : vector<16x8x48xf32> to vector<13x8x48xf32>
    %c1 = arith.constant 1 : index
    %c0_12 = arith.constant 0 : index
    %c3 = arith.constant 3 : index
    %8 = vector.load %arg13[%c1, %c0_12, %c3] : memref<14x8x270xf32, #tpu.memory_space<vmem>>, vector<13x8x48xf32>
    tpu.vector_store %arg13[%c1, %c0_12, %c3], %7 {strides = array<i32>} : memref<14x8x270xf32, #tpu.memory_space<vmem>>, vector<13x8x48xf32>,
    %9 = vector.extract_strided_slice %6 {offsets = [0, 0, 0], sizes = [14, 8, 48], strides = [1, 1, 1]} : vector<16x8x48xf32> to vector<14x8x48xf32>
    %c0_13 = arith.constant 0 : index
    %c0_14 = arith.constant 0 : index
    %c57 = arith.constant 57 : index
    %10 = vector.load %arg13[%c0_13, %c0_14, %c57] : memref<14x8x270xf32, #tpu.memory_space<vmem>>, vector<14x8x48xf32>
    tpu.vector_store %arg13[%c0_13, %c0_14, %c57], %9 {strides = array<i32>} : memref<14x8x270xf32, #tpu.memory_space<vmem>>, vector<14x8x48xf32>,
    %11 = vector.extract_strided_slice %6 {offsets = [1, 0, 0], sizes = [14, 8, 48], strides = [1, 1, 1]} : vector<16x8x48xf32> to vector<14x8x48xf32>
    %c0_15 = arith.constant 0 : index
    %c0_16 = arith.constant 0 : index
    %c111 = arith.constant 111 : index
    %12 = vector.load %arg13[%c0_15, %c0_16, %c111] : memref<14x8x270xf32, #tpu.memory_space<vmem>>, vector<14x8x48xf32>
    tpu.vector_store %arg13[%c0_15, %c0_16, %c111], %11 {strides = array<i32>} : memref<14x8x270xf32, #tpu.memory_space<vmem>>, vector<14x8x48xf32>,
    %13 = vector.extract_strided_slice %6 {offsets = [2, 0, 0], sizes = [14, 8, 48], strides = [1, 1, 1]} : vector<16x8x48xf32> to vector<14x8x48xf32>
    %c0_17 = arith.constant 0 : index
    %c0_18 = arith.constant 0 : index
    %c165 = arith.constant 165 : index
    %14 = vector.load %arg13[%c0_17, %c0_18, %c165] : memref<14x8x270xf32, #tpu.memory_space<vmem>>, vector<14x8x48xf32>
    tpu.vector_store %arg13[%c0_17, %c0_18, %c165], %13 {strides = array<i32>} : memref<14x8x270xf32, #tpu.memory_space<vmem>>, vector<14x8x48xf32>,
    %15 = vector.extract_strided_slice %6 {offsets = [3, 0, 0], sizes = [13, 8, 48], strides = [1, 1, 1]} : vector<16x8x48xf32> to vector<13x8x48xf32>
    %c0_19 = arith.constant 0 : index
    %c0_20 = arith.constant 0 : index
    %c219 = arith.constant 219 : index
    %16 = vector.load %arg13[%c0_19, %c0_20, %c219] : memref<14x8x270xf32, #tpu.memory_space<vmem>>, vector<13x8x48xf32>
    tpu.vector_store %arg13[%c0_19, %c0_20, %c219], %15 {strides = array<i32>} : memref<14x8x270xf32, #tpu.memory_space<vmem>>, vector<13x8x48xf32>,
    %c0_21 = arith.constant 0 : index
    %c0_22 = arith.constant 0 : index
    %c0_23 = arith.constant 0 : index
    %17 = vector.load %arg13[%c0_21, %c0_22, %c0_23] : memref<14x8x270xf32, #tpu.memory_space<vmem>>, vector<14x8x270xf32>
    %18 = vector.shape_cast %17 : vector<14x8x270xf32> to vector<112x270xf32>
    %c0_24 = arith.constant 0 : index
    %c0_25 = arith.constant 0 : index
    %19 = vector.load %arg2[%c0_24, %c0_25] : memref<270x128xf32, #tpu.memory_space<vmem>>, vector<270x128xf32>
    %cst_26 = arith.constant dense<0.000000e+00> : vector<112x128xf32>
    %20 = tpu.matmul %18, %19, %cst_26 {dimension_numbers = #tpu.dot_dimension_numbers<[1], [0], [0], [1], [0, 0, 1, 1], [], []>} : vector<112x270xf32>, vector<270x128xf32>, vector<112x128xf32> -> vector<112x128xf32>
    %c0_27 = arith.constant 0 : index
    %c0_28 = arith.constant 0 : index
    %21 = vector.load %arg3[%c0_27, %c0_28] : memref<1x128xf32, #tpu.memory_space<vmem>>, vector<1x128xf32>
    %22 = vector.broadcast %21 : vector<1x128xf32> to vector<112x128xf32>
    %23 = arith.addf %20, %22 : vector<112x128xf32>
    %cst_29 = arith.constant 0.000000e+00 : f32
    %24 = vector.broadcast %cst_29 : f32 to vector<112x128xf32>
    %25 = arith.maximumf %23, %24 : vector<112x128xf32>
    %26 = vector.extract_strided_slice %25 {offsets = [0, 0], sizes = [8, 128], strides = [1, 1]} : vector<112x128xf32> to vector<8x128xf32>
    %27 = vector.extract_strided_slice %25 {offsets = [8, 0], sizes = [8, 128], strides = [1, 1]} : vector<112x128xf32> to vector<8x128xf32>
    %28 = arith.maximumf %26, %27 : vector<8x128xf32>
    %29 = vector.extract_strided_slice %28 {offsets = [0, 0], sizes = [8, 42], strides = [1, 1]} : vector<8x128xf32> to vector<8x42xf32>
    %30 = vector.extract_strided_slice %28 {offsets = [0, 64], sizes = [8, 42], strides = [1, 1]} : vector<8x128xf32> to vector<8x42xf32>
    %31 = arith.maximumf %29, %30 : vector<8x42xf32>
    %c1_30 = arith.constant 1 : index
    %c0_31 = arith.constant 0 : index
    %c6 = arith.constant 6 : index
    %32 = vector.load %arg14[%c1_30, %c0_31, %c6] : memref<5x8x270xf32, #tpu.memory_space<vmem>>, vector<1x8x42xf32>
    %33 = vector.shape_cast %32 : vector<1x8x42xf32> to vector<8x42xf32>
    %34 = vector.shape_cast %31 : vector<8x42xf32> to vector<1x8x42xf32>
    tpu.vector_store %arg14[%c1_30, %c0_31, %c6], %34 {strides = array<i32>} : memref<5x8x270xf32, #tpu.memory_space<vmem>>, vector<1x8x42xf32>,
    %c0_32 = arith.constant 0 : index
    %c0_33 = arith.constant 0 : index
    %c60 = arith.constant 60 : index
    %35 = vector.load %arg14[%c0_32, %c0_33, %c60] : memref<5x8x270xf32, #tpu.memory_space<vmem>>, vector<1x8x42xf32>
    %36 = vector.shape_cast %35 : vector<1x8x42xf32> to vector<8x42xf32>
    %37 = vector.shape_cast %31 : vector<8x42xf32> to vector<1x8x42xf32>
    tpu.vector_store %arg14[%c0_32, %c0_33, %c60], %37 {strides = array<i32>} : memref<5x8x270xf32, #tpu.memory_space<vmem>>, vector<1x8x42xf32>,
    %38 = vector.extract_strided_slice %25 {offsets = [16, 0], sizes = [8, 128], strides = [1, 1]} : vector<112x128xf32> to vector<8x128xf32>
    %39 = vector.extract_strided_slice %25 {offsets = [24, 0], sizes = [8, 128], strides = [1, 1]} : vector<112x128xf32> to vector<8x128xf32>
    %40 = arith.maximumf %38, %39 : vector<8x128xf32>
    %41 = vector.extract_strided_slice %40 {offsets = [0, 0], sizes = [8, 42], strides = [1, 1]} : vector<8x128xf32> to vector<8x42xf32>
    %42 = vector.extract_strided_slice %40 {offsets = [0, 64], sizes = [8, 42], strides = [1, 1]} : vector<8x128xf32> to vector<8x42xf32>
    %43 = arith.maximumf %41, %42 : vector<8x42xf32>
    %c2 = arith.constant 2 : index
    %c0_34 = arith.constant 0 : index
    %c6_35 = arith.constant 6 : index
    %44 = vector.load %arg14[%c2, %c0_34, %c6_35] : memref<5x8x270xf32, #tpu.memory_space<vmem>>, vector<1x8x42xf32>
    %45 = vector.shape_cast %44 : vector<1x8x42xf32> to vector<8x42xf32>
    %46 = vector.shape_cast %43 : vector<8x42xf32> to vector<1x8x42xf32>
    tpu.vector_store %arg14[%c2, %c0_34, %c6_35], %46 {strides = array<i32>} : memref<5x8x270xf32, #tpu.memory_space<vmem>>, vector<1x8x42xf32>,
    %c1_36 = arith.constant 1 : index
    %c0_37 = arith.constant 0 : index
    %c60_38 = arith.constant 60 : index
    %47 = vector.load %arg14[%c1_36, %c0_37, %c60_38] : memref<5x8x270xf32, #tpu.memory_space<vmem>>, vector<1x8x42xf32>
    %48 = vector.shape_cast %47 : vector<1x8x42xf32> to vector<8x42xf32>
    %49 = vector.shape_cast %43 : vector<8x42xf32> to vector<1x8x42xf32>
    tpu.vector_store %arg14[%c1_36, %c0_37, %c60_38], %49 {strides = array<i32>} : memref<5x8x270xf32, #tpu.memory_space<vmem>>, vector<1x8x42xf32>,
    %c0_39 = arith.constant 0 : index
    %c0_40 = arith.constant 0 : index
    %c114 = arith.constant 114 : index
    %50 = vector.load %arg14[%c0_39, %c0_40, %c114] : memref<5x8x270xf32, #tpu.memory_space<vmem>>, vector<1x8x42xf32>
    %51 = vector.shape_cast %50 : vector<1x8x42xf32> to vector<8x42xf32>
    %52 = vector.shape_cast %43 : vector<8x42xf32> to vector<1x8x42xf32>
    tpu.vector_store %arg14[%c0_39, %c0_40, %c114], %52 {strides = array<i32>} : memref<5x8x270xf32, #tpu.memory_space<vmem>>, vector<1x8x42xf32>,
    %53 = vector.extract_strided_slice %25 {offsets = [32, 0], sizes = [8, 128], strides = [1, 1]} : vector<112x128xf32> to vector<8x128xf32>
    %54 = vector.extract_strided_slice %25 {offsets = [40, 0], sizes = [8, 128], strides = [1, 1]} : vector<112x128xf32> to vector<8x128xf32>
    %55 = arith.maximumf %53, %54 : vector<8x128xf32>
    %56 = vector.extract_strided_slice %55 {offsets = [0, 0], sizes = [8, 42], strides = [1, 1]} : vector<8x128xf32> to vector<8x42xf32>
    %57 = vector.extract_strided_slice %55 {offsets = [0, 64], sizes = [8, 42], strides = [1, 1]} : vector<8x128xf32> to vector<8x42xf32>
    %58 = arith.maximumf %56, %57 : vector<8x42xf32>
    %c3_41 = arith.constant 3 : index
    %c0_42 = arith.constant 0 : index
    %c6_43 = arith.constant 6 : index
    %59 = vector.load %arg14[%c3_41, %c0_42, %c6_43] : memref<5x8x270xf32, #tpu.memory_space<vmem>>, vector<1x8x42xf32>
    %60 = vector.shape_cast %59 : vector<1x8x42xf32> to vector<8x42xf32>
    %61 = vector.shape_cast %58 : vector<8x42xf32> to vector<1x8x42xf32>
    tpu.vector_store %arg14[%c3_41, %c0_42, %c6_43], %61 {strides = array<i32>} : memref<5x8x270xf32, #tpu.memory_space<vmem>>, vector<1x8x42xf32>,
    %c2_44 = arith.constant 2 : index
    %c0_45 = arith.constant 0 : index
    %c60_46 = arith.constant 60 : index
    %62 = vector.load %arg14[%c2_44, %c0_45, %c60_46] : memref<5x8x270xf32, #tpu.memory_space<vmem>>, vector<1x8x42xf32>
    %63 = vector.shape_cast %62 : vector<1x8x42xf32> to vector<8x42xf32>
    %64 = vector.shape_cast %58 : vector<8x42xf32> to vector<1x8x42xf32>
    tpu.vector_store %arg14[%c2_44, %c0_45, %c60_46], %64 {strides = array<i32>} : memref<5x8x270xf32, #tpu.memory_space<vmem>>, vector<1x8x42xf32>,
    %c1_47 = arith.constant 1 : index
    %c0_48 = arith.constant 0 : index
    %c114_49 = arith.constant 114 : index
    %65 = vector.load %arg14[%c1_47, %c0_48, %c114_49] : memref<5x8x270xf32, #tpu.memory_space<vmem>>, vector<1x8x42xf32>
    %66 = vector.shape_cast %65 : vector<1x8x42xf32> to vector<8x42xf32>
    %67 = vector.shape_cast %58 : vector<8x42xf32> to vector<1x8x42xf32>
    tpu.vector_store %arg14[%c1_47, %c0_48, %c114_49], %67 {strides = array<i32>} : memref<5x8x270xf32, #tpu.memory_space<vmem>>, vector<1x8x42xf32>,
    %c0_50 = arith.constant 0 : index
    %c0_51 = arith.constant 0 : index
    %c168 = arith.constant 168 : index
    %68 = vector.load %arg14[%c0_50, %c0_51, %c168] : memref<5x8x270xf32, #tpu.memory_space<vmem>>, vector<1x8x42xf32>
    %69 = vector.shape_cast %68 : vector<1x8x42xf32> to vector<8x42xf32>
    %70 = vector.shape_cast %58 : vector<8x42xf32> to vector<1x8x42xf32>
    tpu.vector_store %arg14[%c0_50, %c0_51, %c168], %70 {strides = array<i32>} : memref<5x8x270xf32, #tpu.memory_space<vmem>>, vector<1x8x42xf32>,
    %71 = vector.extract_strided_slice %25 {offsets = [48, 0], sizes = [8, 128], strides = [1, 1]} : vector<112x128xf32> to vector<8x128xf32>
    %72 = vector.extract_strided_slice %25 {offsets = [56, 0], sizes = [8, 128], strides = [1, 1]} : vector<112x128xf32> to vector<8x128xf32>
    %73 = arith.maximumf %71, %72 : vector<8x128xf32>
    %74 = vector.extract_strided_slice %73 {offsets = [0, 0], sizes = [8, 42], strides = [1, 1]} : vector<8x128xf32> to vector<8x42xf32>
    %75 = vector.extract_strided_slice %73 {offsets = [0, 64], sizes = [8, 42], strides = [1, 1]} : vector<8x128xf32> to vector<8x42xf32>
    %76 = arith.maximumf %74, %75 : vector<8x42xf32>
    %c4 = arith.constant 4 : index
    %c0_52 = arith.constant 0 : index
    %c6_53 = arith.constant 6 : index
    %77 = vector.load %arg14[%c4, %c0_52, %c6_53] : memref<5x8x270xf32, #tpu.memory_space<vmem>>, vector<1x8x42xf32>
    %78 = vector.shape_cast %77 : vector<1x8x42xf32> to vector<8x42xf32>
    %79 = vector.shape_cast %76 : vector<8x42xf32> to vector<1x8x42xf32>
    tpu.vector_store %arg14[%c4, %c0_52, %c6_53], %79 {strides = array<i32>} : memref<5x8x270xf32, #tpu.memory_space<vmem>>, vector<1x8x42xf32>,
    %c3_54 = arith.constant 3 : index
    %c0_55 = arith.constant 0 : index
    %c60_56 = arith.constant 60 : index
    %80 = vector.load %arg14[%c3_54, %c0_55, %c60_56] : memref<5x8x270xf32, #tpu.memory_space<vmem>>, vector<1x8x42xf32>
    %81 = vector.shape_cast %80 : vector<1x8x42xf32> to vector<8x42xf32>
    %82 = vector.shape_cast %76 : vector<8x42xf32> to vector<1x8x42xf32>
    tpu.vector_store %arg14[%c3_54, %c0_55, %c60_56], %82 {strides = array<i32>} : memref<5x8x270xf32, #tpu.memory_space<vmem>>, vector<1x8x42xf32>,
    %c2_57 = arith.constant 2 : index
    %c0_58 = arith.constant 0 : index
    %c114_59 = arith.constant 114 : index
    %83 = vector.load %arg14[%c2_57, %c0_58, %c114_59] : memref<5x8x270xf32, #tpu.memory_space<vmem>>, vector<1x8x42xf32>
    %84 = vector.shape_cast %83 : vector<1x8x42xf32> to vector<8x42xf32>
    %85 = vector.shape_cast %76 : vector<8x42xf32> to vector<1x8x42xf32>
    tpu.vector_store %arg14[%c2_57, %c0_58, %c114_59], %85 {strides = array<i32>} : memref<5x8x270xf32, #tpu.memory_space<vmem>>, vector<1x8x42xf32>,
    %c1_60 = arith.constant 1 : index
    %c0_61 = arith.constant 0 : index
    %c168_62 = arith.constant 168 : index
    %86 = vector.load %arg14[%c1_60, %c0_61, %c168_62] : memref<5x8x270xf32, #tpu.memory_space<vmem>>, vector<1x8x42xf32>
    %87 = vector.shape_cast %86 : vector<1x8x42xf32> to vector<8x42xf32>
    %88 = vector.shape_cast %76 : vector<8x42xf32> to vector<1x8x42xf32>
    tpu.vector_store %arg14[%c1_60, %c0_61, %c168_62], %88 {strides = array<i32>} : memref<5x8x270xf32, #tpu.memory_space<vmem>>, vector<1x8x42xf32>,
    %c0_63 = arith.constant 0 : index
    %c0_64 = arith.constant 0 : index
    %c222 = arith.constant 222 : index
    %89 = vector.load %arg14[%c0_63, %c0_64, %c222] : memref<5x8x270xf32, #tpu.memory_space<vmem>>, vector<1x8x42xf32>
    %90 = vector.shape_cast %89 : vector<1x8x42xf32> to vector<8x42xf32>
    %91 = vector.shape_cast %76 : vector<8x42xf32> to vector<1x8x42xf32>
    tpu.vector_store %arg14[%c0_63, %c0_64, %c222], %91 {strides = array<i32>} : memref<5x8x270xf32, #tpu.memory_space<vmem>>, vector<1x8x42xf32>,
    %92 = vector.extract_strided_slice %25 {offsets = [64, 0], sizes = [8, 128], strides = [1, 1]} : vector<112x128xf32> to vector<8x128xf32>
    %93 = vector.extract_strided_slice %25 {offsets = [72, 0], sizes = [8, 128], strides = [1, 1]} : vector<112x128xf32> to vector<8x128xf32>
    %94 = arith.maximumf %92, %93 : vector<8x128xf32>
    %95 = vector.extract_strided_slice %94 {offsets = [0, 0], sizes = [8, 42], strides = [1, 1]} : vector<8x128xf32> to vector<8x42xf32>
    %96 = vector.extract_strided_slice %94 {offsets = [0, 64], sizes = [8, 42], strides = [1, 1]} : vector<8x128xf32> to vector<8x42xf32>
    %97 = arith.maximumf %95, %96 : vector<8x42xf32>
    %c4_65 = arith.constant 4 : index
    %c0_66 = arith.constant 0 : index
    %c60_67 = arith.constant 60 : index
    %98 = vector.load %arg14[%c4_65, %c0_66, %c60_67] : memref<5x8x270xf32, #tpu.memory_space<vmem>>, vector<1x8x42xf32>
    %99 = vector.shape_cast %98 : vector<1x8x42xf32> to vector<8x42xf32>
    %100 = vector.shape_cast %97 : vector<8x42xf32> to vector<1x8x42xf32>
    tpu.vector_store %arg14[%c4_65, %c0_66, %c60_67], %100 {strides = array<i32>} : memref<5x8x270xf32, #tpu.memory_space<vmem>>, vector<1x8x42xf32>,
    %c3_68 = arith.constant 3 : index
    %c0_69 = arith.constant 0 : index
    %c114_70 = arith.constant 114 : index
    %101 = vector.load %arg14[%c3_68, %c0_69, %c114_70] : memref<5x8x270xf32, #tpu.memory_space<vmem>>, vector<1x8x42xf32>
    %102 = vector.shape_cast %101 : vector<1x8x42xf32> to vector<8x42xf32>
    %103 = vector.shape_cast %97 : vector<8x42xf32> to vector<1x8x42xf32>
    tpu.vector_store %arg14[%c3_68, %c0_69, %c114_70], %103 {strides = array<i32>} : memref<5x8x270xf32, #tpu.memory_space<vmem>>, vector<1x8x42xf32>,
    %c2_71 = arith.constant 2 : index
    %c0_72 = arith.constant 0 : index
    %c168_73 = arith.constant 168 : index
    %104 = vector.load %arg14[%c2_71, %c0_72, %c168_73] : memref<5x8x270xf32, #tpu.memory_space<vmem>>, vector<1x8x42xf32>
    %105 = vector.shape_cast %104 : vector<1x8x42xf32> to vector<8x42xf32>
    %106 = vector.shape_cast %97 : vector<8x42xf32> to vector<1x8x42xf32>
    tpu.vector_store %arg14[%c2_71, %c0_72, %c168_73], %106 {strides = array<i32>} : memref<5x8x270xf32, #tpu.memory_space<vmem>>, vector<1x8x42xf32>,
    %c1_74 = arith.constant 1 : index
    %c0_75 = arith.constant 0 : index
    %c222_76 = arith.constant 222 : index
    %107 = vector.load %arg14[%c1_74, %c0_75, %c222_76] : memref<5x8x270xf32, #tpu.memory_space<vmem>>, vector<1x8x42xf32>
    %108 = vector.shape_cast %107 : vector<1x8x42xf32> to vector<8x42xf32>
    %109 = vector.shape_cast %97 : vector<8x42xf32> to vector<1x8x42xf32>
    tpu.vector_store %arg14[%c1_74, %c0_75, %c222_76], %109 {strides = array<i32>} : memref<5x8x270xf32, #tpu.memory_space<vmem>>, vector<1x8x42xf32>,
    %110 = vector.extract_strided_slice %25 {offsets = [80, 0], sizes = [8, 128], strides = [1, 1]} : vector<112x128xf32> to vector<8x128xf32>
    %111 = vector.extract_strided_slice %25 {offsets = [88, 0], sizes = [8, 128], strides = [1, 1]} : vector<112x128xf32> to vector<8x128xf32>
    %112 = arith.maximumf %110, %111 : vector<8x128xf32>
    %113 = vector.extract_strided_slice %112 {offsets = [0, 0], sizes = [8, 42], strides = [1, 1]} : vector<8x128xf32> to vector<8x42xf32>
    %114 = vector.extract_strided_slice %112 {offsets = [0, 64], sizes = [8, 42], strides = [1, 1]} : vector<8x128xf32> to vector<8x42xf32>
    %115 = arith.maximumf %113, %114 : vector<8x42xf32>
    %c4_77 = arith.constant 4 : index
    %c0_78 = arith.constant 0 : index
    %c114_79 = arith.constant 114 : index
    %116 = vector.load %arg14[%c4_77, %c0_78, %c114_79] : memref<5x8x270xf32, #tpu.memory_space<vmem>>, vector<1x8x42xf32>
    %117 = vector.shape_cast %116 : vector<1x8x42xf32> to vector<8x42xf32>
    %118 = vector.shape_cast %115 : vector<8x42xf32> to vector<1x8x42xf32>
    tpu.vector_store %arg14[%c4_77, %c0_78, %c114_79], %118 {strides = array<i32>} : memref<5x8x270xf32, #tpu.memory_space<vmem>>, vector<1x8x42xf32>,
    %c3_80 = arith.constant 3 : index
    %c0_81 = arith.constant 0 : index
    %c168_82 = arith.constant 168 : index
    %119 = vector.load %arg14[%c3_80, %c0_81, %c168_82] : memref<5x8x270xf32, #tpu.memory_space<vmem>>, vector<1x8x42xf32>
    %120 = vector.shape_cast %119 : vector<1x8x42xf32> to vector<8x42xf32>
    %121 = vector.shape_cast %115 : vector<8x42xf32> to vector<1x8x42xf32>
    tpu.vector_store %arg14[%c3_80, %c0_81, %c168_82], %121 {strides = array<i32>} : memref<5x8x270xf32, #tpu.memory_space<vmem>>, vector<1x8x42xf32>,
    %c2_83 = arith.constant 2 : index
    %c0_84 = arith.constant 0 : index
    %c222_85 = arith.constant 222 : index
    %122 = vector.load %arg14[%c2_83, %c0_84, %c222_85] : memref<5x8x270xf32, #tpu.memory_space<vmem>>, vector<1x8x42xf32>
    %123 = vector.shape_cast %122 : vector<1x8x42xf32> to vector<8x42xf32>
    %124 = vector.shape_cast %115 : vector<8x42xf32> to vector<1x8x42xf32>
    tpu.vector_store %arg14[%c2_83, %c0_84, %c222_85], %124 {strides = array<i32>} : memref<5x8x270xf32, #tpu.memory_space<vmem>>, vector<1x8x42xf32>,
    %125 = vector.extract_strided_slice %25 {offsets = [96, 0], sizes = [8, 128], strides = [1, 1]} : vector<112x128xf32> to vector<8x128xf32>
    %126 = vector.extract_strided_slice %25 {offsets = [104, 0], sizes = [8, 128], strides = [1, 1]} : vector<112x128xf32> to vector<8x128xf32>
    %127 = arith.maximumf %125, %126 : vector<8x128xf32>
    %128 = vector.extract_strided_slice %127 {offsets = [0, 0], sizes = [8, 42], strides = [1, 1]} : vector<8x128xf32> to vector<8x42xf32>
    %129 = vector.extract_strided_slice %127 {offsets = [0, 64], sizes = [8, 42], strides = [1, 1]} : vector<8x128xf32> to vector<8x42xf32>
    %130 = arith.maximumf %128, %129 : vector<8x42xf32>
    %c4_86 = arith.constant 4 : index
    %c0_87 = arith.constant 0 : index
    %c168_88 = arith.constant 168 : index
    %131 = vector.load %arg14[%c4_86, %c0_87, %c168_88] : memref<5x8x270xf32, #tpu.memory_space<vmem>>, vector<1x8x42xf32>
    %132 = vector.shape_cast %131 : vector<1x8x42xf32> to vector<8x42xf32>
    %133 = vector.shape_cast %130 : vector<8x42xf32> to vector<1x8x42xf32>
    tpu.vector_store %arg14[%c4_86, %c0_87, %c168_88], %133 {strides = array<i32>} : memref<5x8x270xf32, #tpu.memory_space<vmem>>, vector<1x8x42xf32>,
    %c3_89 = arith.constant 3 : index
    %c0_90 = arith.constant 0 : index
    %c222_91 = arith.constant 222 : index
    %134 = vector.load %arg14[%c3_89, %c0_90, %c222_91] : memref<5x8x270xf32, #tpu.memory_space<vmem>>, vector<1x8x42xf32>
    %135 = vector.shape_cast %134 : vector<1x8x42xf32> to vector<8x42xf32>
    %136 = vector.shape_cast %130 : vector<8x42xf32> to vector<1x8x42xf32>
    tpu.vector_store %arg14[%c3_89, %c0_90, %c222_91], %136 {strides = array<i32>} : memref<5x8x270xf32, #tpu.memory_space<vmem>>, vector<1x8x42xf32>,
    %c0_92 = arith.constant 0 : index
    %c0_93 = arith.constant 0 : index
    %c0_94 = arith.constant 0 : index
    %137 = vector.load %arg14[%c0_92, %c0_93, %c0_94] : memref<5x8x270xf32, #tpu.memory_space<vmem>>, vector<5x8x270xf32>
    %138 = vector.shape_cast %137 : vector<5x8x270xf32> to vector<40x270xf32>
    %c0_95 = arith.constant 0 : index
    %c0_96 = arith.constant 0 : index
    %139 = vector.load %arg4[%c0_95, %c0_96] : memref<270x128xf32, #tpu.memory_space<vmem>>, vector<270x128xf32>
    %cst_97 = arith.constant dense<0.000000e+00> : vector<40x128xf32>
    %140 = tpu.matmul %138, %139, %cst_97 {dimension_numbers = #tpu.dot_dimension_numbers<[1], [0], [0], [1], [0, 0, 1, 1], [], []>} : vector<40x270xf32>, vector<270x128xf32>, vector<40x128xf32> -> vector<40x128xf32>
    %c0_98 = arith.constant 0 : index
    %c0_99 = arith.constant 0 : index
    %141 = vector.load %arg5[%c0_98, %c0_99] : memref<1x128xf32, #tpu.memory_space<vmem>>, vector<1x128xf32>
    %142 = vector.broadcast %141 : vector<1x128xf32> to vector<40x128xf32>
    %143 = arith.addf %140, %142 : vector<40x128xf32>
    %cst_100 = arith.constant 0.000000e+00 : f32
    %144 = vector.broadcast %cst_100 : f32 to vector<40x128xf32>
    %145 = arith.maximumf %143, %144 : vector<40x128xf32>
    %146 = vector.extract_strided_slice %145 {offsets = [0, 0], sizes = [8, 128], strides = [1, 1]} : vector<40x128xf32> to vector<8x128xf32>
    %147 = vector.extract_strided_slice %145 {offsets = [8, 0], sizes = [8, 128], strides = [1, 1]} : vector<40x128xf32> to vector<8x128xf32>
    %148 = arith.maximumf %146, %147 : vector<8x128xf32>
    %149 = vector.extract_strided_slice %148 {offsets = [0, 0], sizes = [8, 32], strides = [1, 1]} : vector<8x128xf32> to vector<8x32xf32>
    %150 = vector.extract_strided_slice %148 {offsets = [0, 64], sizes = [8, 32], strides = [1, 1]} : vector<8x128xf32> to vector<8x32xf32>
    %151 = arith.maximumf %149, %150 : vector<8x32xf32>
    %c0_101 = arith.constant 0 : index
    %c0_102 = arith.constant 0 : index
    %152 = vector.load %arg15[%c0_101, %c0_102] : memref<8x128xf32, #tpu.memory_space<vmem>>, vector<8x32xf32>
    tpu.vector_store %arg15[%c0_101, %c0_102], %151 {strides = array<i32>} : memref<8x128xf32, #tpu.memory_space<vmem>>, vector<8x32xf32>,
    %153 = vector.extract_strided_slice %145 {offsets = [16, 0], sizes = [8, 128], strides = [1, 1]} : vector<40x128xf32> to vector<8x128xf32>
    %154 = vector.extract_strided_slice %145 {offsets = [24, 0], sizes = [8, 128], strides = [1, 1]} : vector<40x128xf32> to vector<8x128xf32>
    %155 = arith.maximumf %153, %154 : vector<8x128xf32>
    %156 = vector.extract_strided_slice %155 {offsets = [0, 0], sizes = [8, 32], strides = [1, 1]} : vector<8x128xf32> to vector<8x32xf32>
    %157 = vector.extract_strided_slice %155 {offsets = [0, 64], sizes = [8, 32], strides = [1, 1]} : vector<8x128xf32> to vector<8x32xf32>
    %158 = arith.maximumf %156, %157 : vector<8x32xf32>
    %c0_103 = arith.constant 0 : index
    %c32 = arith.constant 32 : index
    %159 = vector.load %arg15[%c0_103, %c32] : memref<8x128xf32, #tpu.memory_space<vmem>>, vector<8x32xf32>
    tpu.vector_store %arg15[%c0_103, %c32], %158 {strides = array<i32>} : memref<8x128xf32, #tpu.memory_space<vmem>>, vector<8x32xf32>,
    %c0_104 = arith.constant 0 : index
    %c0_105 = arith.constant 0 : index
    %160 = vector.load %arg15[%c0_104, %c0_105] : memref<8x128xf32, #tpu.memory_space<vmem>>, vector<8x128xf32>
    %c0_106 = arith.constant 0 : index
    %c0_107 = arith.constant 0 : index
    %161 = vector.load %arg6[%c0_106, %c0_107] : memref<128x128xf32, #tpu.memory_space<vmem>>, vector<128x128xf32>
    %cst_108 = arith.constant dense<0.000000e+00> : vector<8x128xf32>
    %162 = tpu.matmul %160, %161, %cst_108 {dimension_numbers = #tpu.dot_dimension_numbers<[1], [0], [0], [1], [0, 0, 1, 1], [], []>} : vector<8x128xf32>, vector<128x128xf32>, vector<8x128xf32> -> vector<8x128xf32>
    %c0_109 = arith.constant 0 : index
    %c0_110 = arith.constant 0 : index
    %163 = vector.load %arg7[%c0_109, %c0_110] : memref<1x128xf32, #tpu.memory_space<vmem>>, vector<1x128xf32>
    %164 = vector.broadcast %163 : vector<1x128xf32> to vector<8x128xf32>
    %165 = arith.addf %162, %164 : vector<8x128xf32>
    %cst_111 = arith.constant 0.000000e+00 : f32
    %166 = vector.broadcast %cst_111 : f32 to vector<8x128xf32>
    %167 = arith.maximumf %165, %166 : vector<8x128xf32>
    %c0_112 = arith.constant 0 : index
    %c0_113 = arith.constant 0 : index
    %168 = vector.load %arg8[%c0_112, %c0_113] : memref<128x128xf32, #tpu.memory_space<vmem>>, vector<128x128xf32>
    %cst_114 = arith.constant dense<0.000000e+00> : vector<8x128xf32>
    %169 = tpu.matmul %167, %168, %cst_114 {dimension_numbers = #tpu.dot_dimension_numbers<[1], [0], [0], [1], [0, 0, 1, 1], [], []>} : vector<8x128xf32>, vector<128x128xf32>, vector<8x128xf32> -> vector<8x128xf32>
    %c0_115 = arith.constant 0 : index
    %c0_116 = arith.constant 0 : index
    %170 = vector.load %arg9[%c0_115, %c0_116] : memref<1x128xf32, #tpu.memory_space<vmem>>, vector<1x128xf32>
    %171 = vector.broadcast %170 : vector<1x128xf32> to vector<8x128xf32>
    %172 = arith.addf %169, %171 : vector<8x128xf32>
    %cst_117 = arith.constant 0.000000e+00 : f32
    %173 = vector.broadcast %cst_117 : f32 to vector<8x128xf32>
    %174 = arith.maximumf %172, %173 : vector<8x128xf32>
    %c0_118 = arith.constant 0 : index
    %c0_119 = arith.constant 0 : index
    %175 = vector.load %arg10[%c0_118, %c0_119] : memref<128x128xf32, #tpu.memory_space<vmem>>, vector<128x128xf32>
    %cst_120 = arith.constant dense<0.000000e+00> : vector<8x128xf32>
    %176 = tpu.matmul %174, %175, %cst_120 {dimension_numbers = #tpu.dot_dimension_numbers<[1], [0], [0], [1], [0, 0, 1, 1], [], []>} : vector<8x128xf32>, vector<128x128xf32>, vector<8x128xf32> -> vector<8x128xf32>
    %c0_121 = arith.constant 0 : index
    %c0_122 = arith.constant 0 : index
    %177 = vector.load %arg11[%c0_121, %c0_122] : memref<1x128xf32, #tpu.memory_space<vmem>>, vector<1x128xf32>
    %178 = vector.broadcast %177 : vector<1x128xf32> to vector<8x128xf32>
    %179 = arith.addf %176, %178 : vector<8x128xf32>
    %c0_123 = arith.constant 0 : index
    %c0_124 = arith.constant 0 : index
    %180 = vector.load %arg12[%c0_123, %c0_124] : memref<8x128xf32, #tpu.memory_space<vmem>>, vector<8x128xf32>
    tpu.vector_store %arg12[%c0_123, %c0_124], %179 {strides = array<i32>} : memref<8x128xf32, #tpu.memory_space<vmem>>, vector<8x128xf32>,
    return
  }
  func.func @transform_0(%arg0: i32) -> (i32, i32, i32) {
    %c0_i32 = arith.constant 0 : i32
    %c0_i32_0 = arith.constant 0 : i32
    %c0_i32_1 = arith.constant 0 : i32
    return %c0_i32, %arg0, %c0_i32_0 : i32, i32, i32
  }
  func.func @transform_1(%arg0: i32) -> (i32, i32) {
    %c0_i32 = arith.constant 0 : i32
    %c0_i32_0 = arith.constant 0 : i32
    %c0_i32_1 = arith.constant 0 : i32
    return %c0_i32, %c0_i32_0 : i32, i32
  }
  func.func @transform_2(%arg0: i32) -> (i32, i32) {
    %c0_i32 = arith.constant 0 : i32
    %c0_i32_0 = arith.constant 0 : i32
    %c0_i32_1 = arith.constant 0 : i32
    return %c0_i32, %c0_i32_0 : i32, i32
  }
  func.func @transform_3(%arg0: i32) -> (i32, i32) {
    %c0_i32 = arith.constant 0 : i32
    %c0_i32_0 = arith.constant 0 : i32
    %c0_i32_1 = arith.constant 0 : i32
    return %c0_i32, %c0_i32_0 : i32, i32
  }
  func.func @transform_4(%arg0: i32) -> (i32, i32) {
    %c0_i32 = arith.constant 0 : i32
    %c0_i32_0 = arith.constant 0 : i32
    %c0_i32_1 = arith.constant 0 : i32
    return %c0_i32, %c0_i32_0 : i32, i32
  }
  func.func @transform_5(%arg0: i32) -> (i32, i32) {
    %c0_i32 = arith.constant 0 : i32
    %c0_i32_0 = arith.constant 0 : i32
    %c0_i32_1 = arith.constant 0 : i32
    return %c0_i32, %c0_i32_0 : i32, i32
  }
  func.func @transform_6(%arg0: i32) -> (i32, i32) {
    %c0_i32 = arith.constant 0 : i32
    %c0_i32_0 = arith.constant 0 : i32
    %c0_i32_1 = arith.constant 0 : i32
    return %c0_i32, %c0_i32_0 : i32, i32
  }
  func.func @transform_7(%arg0: i32) -> (i32, i32) {
    %c0_i32 = arith.constant 0 : i32
    %c0_i32_0 = arith.constant 0 : i32
    %c0_i32_1 = arith.constant 0 : i32
    return %c0_i32, %c0_i32_0 : i32, i32
  }
  func.func @transform_8(%arg0: i32) -> (i32, i32) {
    %c0_i32 = arith.constant 0 : i32
    %c0_i32_0 = arith.constant 0 : i32
    %c0_i32_1 = arith.constant 0 : i32
    return %c0_i32, %c0_i32_0 : i32, i32
  }
  func.func @transform_9(%arg0: i32) -> (i32, i32) {
    %c0_i32 = arith.constant 0 : i32
    %c0_i32_0 = arith.constant 0 : i32
    %c0_i32_1 = arith.constant 0 : i32
    return %c0_i32, %c0_i32_0 : i32, i32
  }
  func.func @transform_10(%arg0: i32) -> (i32, i32) {
    %c0_i32 = arith.constant 0 : i32
    %c0_i32_0 = arith.constant 0 : i32
    %c0_i32_1 = arith.constant 0 : i32
    return %c0_i32, %c0_i32_0 : i32, i32
  }
  func.func @transform_11(%arg0: i32) -> (i32, i32) {
    %c0_i32 = arith.constant 0 : i32
    %c0_i32_0 = arith.constant 0 : i32
    return %arg0, %c0_i32 : i32, i32
  }
}

</mosaic_0001>

<llo_original>
// kernel: forward.1
$region0: #{forward.1}
  #allocation0 [shape = 'u32[]', space=smem, size = 0x4, offset = 0x4, fixed_abs, tag = 'smem constant byte address 0x4 - core index']
  #allocation1 [shape = 'u32[144,128]{1,0:T(1,128)}', space=vmem, size = 0x12000, scoped, tag = 'internal scratch']
  #allocation2 [shape = 'f32[14,8,270]{2,1,0:T(8,128)}', space=vmem, size = 0x2a000, scoped, tag = 'scratch operand']
  #allocation3 [shape = 'f32[5,8,270]{2,1,0:T(8,128)}', space=vmem, size = 0xf000, scoped, tag = 'scratch operand']
  #allocation4 [shape = 'f32[8,128]{1,0:T(8,128)}', space=vmem, size = 0x1000, scoped, tag = 'scratch operand']
  %s0 = inlined_call_operand.vmem [shape: f32[16,24,48], index: 0, kind: input, shape index: {}]
  %s1 = inlined_call_operand.vmem [shape: f32[270,128], index: 1, kind: input, shape index: {}]
  %s2 = inlined_call_operand.vmem [shape: f32[1,128], index: 2, kind: input, shape index: {}]
  %s3 = inlined_call_operand.vmem [shape: f32[270,128], index: 3, kind: input, shape index: {}]
  %s4 = inlined_call_operand.vmem [shape: f32[1,128], index: 4, kind: input, shape index: {}]
  %s5 = inlined_call_operand.vmem [shape: f32[128,128], index: 5, kind: input, shape index: {}]
  %s6 = inlined_call_operand.vmem [shape: f32[1,128], index: 6, kind: input, shape index: {}]
  %s7 = inlined_call_operand.vmem [shape: f32[128,128], index: 7, kind: input, shape index: {}]
  %s8 = inlined_call_operand.vmem [shape: f32[1,128], index: 8, kind: input, shape index: {}]
  %s9 = inlined_call_operand.vmem [shape: f32[128,128], index: 9, kind: input, shape index: {}]
  %s10 = inlined_call_operand.vmem [shape: f32[1,128], index: 10, kind: input, shape index: {}]
  %s11 = inlined_call_operand.vmem [shape: f32[24,128], index: 11, kind: output, shape index: {}]
  %s12 = sld [smem:[#allocation0]]
  $region115: #{forward.1} parent=0
    _
  %s14 = ssub.s32 1, %s12
  %s15 = scalar_select 0, %s14, %s12
  $region1: #{forward.1} parent=0
    #allocation5 [shape = 'u8[131072]{0}', space=vmem, size = 0x20000, scoped, tag = 'input window, operand 0']
    loop: start=0, step=1, limit=5
    $region2: #{forward.1} parent=1 // loop_pre_header
      _
    $region3: #{forward.1} parent=1 // loop_header
      %s17 = sphi 0, %s21
      %p18 = scmp.ge.s32.totalorder %s17, 5
      %s27 = sphi 0, %s29
      %s30 = sphi 0, %s27
      %s31 = sphi 0, %s30
      %s47 = sphi 0, %s31
      %s51 = sphi 0, %s51
      %s53 = sphi 0, %s51
      %s54 = sphi 0, %s53
      %s68 = sphi 0, %s54
      %s72 = sphi 0, %s72
      %s74 = sphi 0, %s72
      %s75 = sphi 0, %s74
      %s89 = sphi 0, %s75
      %s93 = sphi 0, %s93
      %s95 = sphi 0, %s93
      %s96 = sphi 0, %s95
      %s110 = sphi 0, %s96
      %s114 = sphi 0, %s114
      %s116 = sphi 0, %s114
      %s117 = sphi 0, %s116
      %s131 = sphi 0, %s117
      %s135 = sphi 0, %s135
      %s137 = sphi 0, %s135
      %s138 = sphi 0, %s137
      %s152 = sphi 0, %s138
      %s156 = sphi 0, %s156
      %s158 = sphi 0, %s156
      %s159 = sphi 0, %s158
      %s173 = sphi 0, %s159
      %s177 = sphi 0, %s177
      %s179 = sphi 0, %s177
      %s180 = sphi 0, %s179
      %s194 = sphi 0, %s180
      %s198 = sphi 0, %s198
      %s200 = sphi 0, %s198
      %s201 = sphi 0, %s200
      %s215 = sphi 0, %s201
      %s219 = sphi 0, %s219
      %s221 = sphi 0, %s219
      %s222 = sphi 0, %s221
      %s236 = sphi 0, %s222
      %s240 = sphi 0, %s240
      %s242 = sphi 0, %s240
      %s243 = sphi 0, %s242
      %s257 = sphi 0, %s243
      %s263 = sphi 0, %s265
      %s266 = sphi 0, %s263
      %s267 = sphi 0, %s266
      %s283 = sphi 0, %s267
    $region4: #{forward.1} parent=1 // loop_header_branch
      %20 = sbr.rel (%p18) target = $region8
    $region5: #{forward.1} parent=1 // loop_body
      %s22 = ssub.s32 %s17, 1
      %s23 = ssub.s32 %s17, 2
      %s24 = sadd.s32 %s17, 1
      %s25 = ssub.s32 %s17, %s24
      %p26 = scmp.eq.s32.totalorder %s25, 0
      %s28 = sadd.s32 %s27, 1
      %s29 = scalar_select %p26, %s27, %s28
      %p32 = pneg %p26
      %p33 = scmp.eq.s32.totalorder %s17, 2
      %p34 = por %p32, %p33
      %p35 = scmp.ne.s32.totalorder %s27, %s30
      %p36 = scmp.eq.s32.totalorder %s17, 0
      %p37 = por %p35, %p36
      %p38 = scmp.ne.s32.totalorder %s27, %s30
      %p39 = scmp.eq.s32.totalorder %s22, 2
      %p40 = por %p38, %p39
      %p41 = scmp.ne.s32.totalorder %s30, %s31
      %p42 = scmp.eq.s32.totalorder %s22, 0
      %p43 = por %p41, %p42
      %p44 = scmp.ne.s32.totalorder %s30, %s31
      %p45 = scmp.eq.s32.totalorder %s23, 2
      %p46 = por %p44, %p45
      %p48 = scmp.ne.s32.totalorder %s31, %s47
      %p49 = scmp.eq.s32.totalorder %s23, 0
      %p50 = por %p48, %p49
      %s52 = sadd.s32 %s51, 1
      %p55 = scmp.eq.s32.totalorder %s17, 2
      %p56 = scmp.ne.s32.totalorder %s51, %s53
      %p57 = scmp.eq.s32.totalorder %s17, 0
      %p58 = por %p56, %p57
      %p59 = scmp.ne.s32.totalorder %s51, %s53
      %p60 = scmp.eq.s32.totalorder %s22, 2
      %p61 = por %p59, %p60
      %p62 = scmp.ne.s32.totalorder %s53, %s54
      %p63 = scmp.eq.s32.totalorder %s22, 0
      %p64 = por %p62, %p63
      %p65 = scmp.ne.s32.totalorder %s53, %s54
      %p66 = scmp.eq.s32.totalorder %s23, 2
      %p67 = por %p65, %p66
      %p69 = scmp.ne.s32.totalorder %s54, %s68
      %p70 = scmp.eq.s32.totalorder %s23, 0
      %p71 = por %p69, %p70
      %s73 = sadd.s32 %s72, 1
      %p76 = scmp.eq.s32.totalorder %s17, 2
      %p77 = scmp.ne.s32.totalorder %s72, %s74
      %p78 = scmp.eq.s32.totalorder %s17, 0
      %p79 = por %p77, %p78
      %p80 = scmp.ne.s32.totalorder %s72, %s74
      %p81 = scmp.eq.s32.totalorder %s22, 2
      %p82 = por %p80, %p81
      %p83 = scmp.ne.s32.totalorder %s74, %s75
      %p84 = scmp.eq.s32.totalorder %s22, 0
      %p85 = por %p83, %p84
      %p86 = scmp.ne.s32.totalorder %s74, %s75
      %p87 = scmp.eq.s32.totalorder %s23, 2
      %p88 = por %p86, %p87
      %p90 = scmp.ne.s32.totalorder %s75, %s89
      %p91 = scmp.eq.s32.totalorder %s23, 0
      %p92 = por %p90, %p91
      %s94 = sadd.s32 %s93, 1
      %p97 = scmp.eq.s32.totalorder %s17, 2
      %p98 = scmp.ne.s32.totalorder %s93, %s95
      %p99 = scmp.eq.s32.totalorder %s17, 0
      %p100 = por %p98, %p99
      %p101 = scmp.ne.s32.totalorder %s93, %s95
      %p102 = scmp.eq.s32.totalorder %s22, 2
      %p103 = por %p101, %p102
      %p104 = scmp.ne.s32.totalorder %s95, %s96
      %p105 = scmp.eq.s32.totalorder %s22, 0
      %p106 = por %p104, %p105
      %p107 = scmp.ne.s32.totalorder %s95, %s96
      %p108 = scmp.eq.s32.totalorder %s23, 2
      %p109 = por %p107, %p108
      %p111 = scmp.ne.s32.totalorder %s96, %s110
      %p112 = scmp.eq.s32.totalorder %s23, 0
      %p113 = por %p111, %p112
      %s115 = sadd.s32 %s114, 1
      %p118 = scmp.eq.s32.totalorder %s17, 2
      %p119 = scmp.ne.s32.totalorder %s114, %s116
      %p120 = scmp.eq.s32.totalorder %s17, 0
      %p121 = por %p119, %p120
      %p122 = scmp.ne.s32.totalorder %s114, %s116
      %p123 = scmp.eq.s32.totalorder %s22, 2
      %p124 = por %p122, %p123
      %p125 = scmp.ne.s32.totalorder %s116, %s117
      %p126 = scmp.eq.s32.totalorder %s22, 0
      %p127 = por %p125, %p126
      %p128 = scmp.ne.s32.totalorder %s116, %s117
      %p129 = scmp.eq.s32.totalorder %s23, 2
      %p130 = por %p128, %p129
      %p132 = scmp.ne.s32.totalorder %s117, %s131
      %p133 = scmp.eq.s32.totalorder %s23, 0
      %p134 = por %p132, %p133
      %s136 = sadd.s32 %s135, 1
      %p139 = scmp.eq.s32.totalorder %s17, 2
      %p140 = scmp.ne.s32.totalorder %s135, %s137
      %p141 = scmp.eq.s32.totalorder %s17, 0
      %p142 = por %p140, %p141
      %p143 = scmp.ne.s32.totalorder %s135, %s137
      %p144 = scmp.eq.s32.totalorder %s22, 2
      %p145 = por %p143, %p144
      %p146 = scmp.ne.s32.totalorder %s137, %s138
      %p147 = scmp.eq.s32.totalorder %s22, 0
      %p148 = por %p146, %p147
      %p149 = scmp.ne.s32.totalorder %s137, %s138
      %p150 = scmp.eq.s32.totalorder %s23, 2
      %p151 = por %p149, %p150
      %p153 = scmp.ne.s32.totalorder %s138, %s152
      %p154 = scmp.eq.s32.totalorder %s23, 0
      %p155 = por %p153, %p154
      %s157 = sadd.s32 %s156, 1
      %p160 = scmp.eq.s32.totalorder %s17, 2
      %p161 = scmp.ne.s32.totalorder %s156, %s158
      %p162 = scmp.eq.s32.totalorder %s17, 0
      %p163 = por %p161, %p162
      %p164 = scmp.ne.s32.totalorder %s156, %s158
      %p165 = scmp.eq.s32.totalorder %s22, 2
      %p166 = por %p164, %p165
      %p167 = scmp.ne.s32.totalorder %s158, %s159
      %p168 = scmp.eq.s32.totalorder %s22, 0
      %p169 = por %p167, %p168
      %p170 = scmp.ne.s32.totalorder %s158, %s159
      %p171 = scmp.eq.s32.totalorder %s23, 2
      %p172 = por %p170, %p171
      %p174 = scmp.ne.s32.totalorder %s159, %s173
      %p175 = scmp.eq.s32.totalorder %s23, 0
      %p176 = por %p174, %p175
      %s178 = sadd.s32 %s177, 1
      %p181 = scmp.eq.s32.totalorder %s17, 2
      %p182 = scmp.ne.s32.totalorder %s177, %s179
      %p183 = scmp.eq.s32.totalorder %s17, 0
      %p184 = por %p182, %p183
      %p185 = scmp.ne.s32.totalorder %s177, %s179
      %p186 = scmp.eq.s32.totalorder %s22, 2
      %p187 = por %p185, %p186
      %p188 = scmp.ne.s32.totalorder %s179, %s180
      %p189 = scmp.eq.s32.totalorder %s22, 0
      %p190 = por %p188, %p189
      %p191 = scmp.ne.s32.totalorder %s179, %s180
      %p192 = scmp.eq.s32.totalorder %s23, 2
      %p193 = por %p191, %p192
      %p195 = scmp.ne.s32.totalorder %s180, %s194
      %p196 = scmp.eq.s32.totalorder %s23, 0
      %p197 = por %p195, %p196
      %s199 = sadd.s32 %s198, 1
      %p202 = scmp.eq.s32.totalorder %s17, 2
      %p203 = scmp.ne.s32.totalorder %s198, %s200
      %p204 = scmp.eq.s32.totalorder %s17, 0
      %p205 = por %p203, %p204
      %p206 = scmp.ne.s32.totalorder %s198, %s200
      %p207 = scmp.eq.s32.totalorder %s22, 2
      %p208 = por %p206, %p207
      %p209 = scmp.ne.s32.totalorder %s200, %s201
      %p210 = scmp.eq.s32.totalorder %s22, 0
      %p211 = por %p209, %p210
      %p212 = scmp.ne.s32.totalorder %s200, %s201
      %p213 = scmp.eq.s32.totalorder %s23, 2
      %p214 = por %p212, %p213
      %p216 = scmp.ne.s32.totalorder %s201, %s215
      %p217 = scmp.eq.s32.totalorder %s23, 0
      %p218 = por %p216, %p217
      %s220 = sadd.s32 %s219, 1
      %p223 = scmp.eq.s32.totalorder %s17, 2
      %p224 = scmp.ne.s32.totalorder %s219, %s221
      %p225 = scmp.eq.s32.totalorder %s17, 0
      %p226 = por %p224, %p225
      %p227 = scmp.ne.s32.totalorder %s219, %s221
      %p228 = scmp.eq.s32.totalorder %s22, 2
      %p229 = por %p227, %p228
      %p230 = scmp.ne.s32.totalorder %s221, %s222
      %p231 = scmp.eq.s32.totalorder %s22, 0
      %p232 = por %p230, %p231
      %p233 = scmp.ne.s32.totalorder %s221, %s222
      %p234 = scmp.eq.s32.totalorder %s23, 2
      %p235 = por %p233, %p234
      %p237 = scmp.ne.s32.totalorder %s222, %s236
      %p238 = scmp.eq.s32.totalorder %s23, 0
      %p239 = por %p237, %p238
      %s241 = sadd.s32 %s240, 1
      %p244 = scmp.eq.s32.totalorder %s17, 2
      %p245 = scmp.ne.s32.totalorder %s240, %s242
      %p246 = scmp.eq.s32.totalorder %s17, 0
      %p247 = por %p245, %p246
      %p248 = scmp.ne.s32.totalorder %s240, %s242
      %p249 = scmp.eq.s32.totalorder %s22, 2
      %p250 = por %p248, %p249
      %p251 = scmp.ne.s32.totalorder %s242, %s243
      %p252 = scmp.eq.s32.totalorder %s22, 0
      %p253 = por %p251, %p252
      %p254 = scmp.ne.s32.totalorder %s242, %s243
      %p255 = scmp.eq.s32.totalorder %s23, 2
      %p256 = por %p254, %p255
      %p258 = scmp.ne.s32.totalorder %s243, %s257
      %p259 = scmp.eq.s32.totalorder %s23, 0
      %p260 = por %p258, %p259
      %s261 = ssub.s32 %s17, %s24
      %p262 = scmp.eq.s32.totalorder %s261, 0
      %s264 = sadd.s32 %s263, 1
      %s265 = scalar_select %p262, %s263, %s264
      %p268 = pneg %p262
      %p269 = scmp.eq.s32.totalorder %s17, 2
      %p270 = por %p268, %p269
      %p271 = scmp.ne.s32.totalorder %s263, %s266
      %p272 = scmp.eq.s32.totalorder %s17, 0
      %p273 = por %p271, %p272
      %p274 = scmp.ne.s32.totalorder %s263, %s266
      %p275 = scmp.eq.s32.totalorder %s22, 2
      %p276 = por %p274, %p275
      %p277 = scmp.ne.s32.totalorder %s266, %s267
      %p278 = scmp.eq.s32.totalorder %s22, 0
      %p279 = por %p277, %p278
      %p280 = scmp.ne.s32.totalorder %s266, %s267
      %p281 = scmp.eq.s32.totalorder %s23, 2
      %p282 = por %p280, %p281
      %p284 = scmp.ne.s32.totalorder %s267, %s283
      %p285 = scmp.eq.s32.totalorder %s23, 0
      %p286 = por %p284, %p285
      %p287 = scmp.le.s32.totalorder 1, %s17
      %p288 = scmp.lt.s32.totalorder %s17, 4
      %p289 = pnand %p287, %p288
      %p290 = pneg %p289
      // Predicated region
      $region9: #{forward.1} parent=5 // pred_check
        _
      $region10: #{forward.1} parent=5 // pred_check_branch
        %292 = sbr.rel (%p289) target = $region12
      $region11: #{forward.1} parent=5 // pred_region
        %s293 = ssub.s32 %s17, 1
        // Predicated region
        $region13: #{forward.1} parent=11 // pred_check
          %p294 = pneg %p64
        $region14: #{forward.1} parent=11 // pred_check_branch
          %296 = sbr.rel (%p294) target = $region16
        $region15: #{forward.1} parent=11 // pred_region
          _
        $region16: #{forward.1} parent=11 // pred_fallthru
          _
        // Predicated region
        $region17: #{forward.1} parent=11 // pred_check
          %p297 = pneg %p85
        $region18: #{forward.1} parent=11 // pred_check_branch
          %299 = sbr.rel (%p297) target = $region20
        $region19: #{forward.1} parent=11 // pred_region
          _
        $region20: #{forward.1} parent=11 // pred_fallthru
          _
        // Predicated region
        $region21: #{forward.1} parent=11 // pred_check
          %p300 = pneg %p106
        $region22: #{forward.1} parent=11 // pred_check_branch
          %302 = sbr.rel (%p300) target = $region24
        $region23: #{forward.1} parent=11 // pred_region
          _
        $region24: #{forward.1} parent=11 // pred_fallthru
          _
        // Predicated region
        $region25: #{forward.1} parent=11 // pred_check
          %p303 = pneg %p127
        $region26: #{forward.1} parent=11 // pred_check_branch
          %305 = sbr.rel (%p303) target = $region28
        $region27: #{forward.1} parent=11 // pred_region
          _
        $region28: #{forward.1} parent=11 // pred_fallthru
          _
        // Predicated region
        $region29: #{forward.1} parent=11 // pred_check
          %p306 = pneg %p148
        $region30: #{forward.1} parent=11 // pred_check_branch
          %308 = sbr.rel (%p306) target = $region32
        $region31: #{forward.1} parent=11 // pred_region
          _
        $region32: #{forward.1} parent=11 // pred_fallthru
          _
        // Predicated region
        $region33: #{forward.1} parent=11 // pred_check
          %p309 = pneg %p169
        $region34: #{forward.1} parent=11 // pred_check_branch
          %311 = sbr.rel (%p309) target = $region36
        $region35: #{forward.1} parent=11 // pred_region
          _
        $region36: #{forward.1} parent=11 // pred_fallthru
          _
        // Predicated region
        $region37: #{forward.1} parent=11 // pred_check
          %p312 = pneg %p190
        $region38: #{forward.1} parent=11 // pred_check_branch
          %314 = sbr.rel (%p312) target = $region40
        $region39: #{forward.1} parent=11 // pred_region
          _
        $region40: #{forward.1} parent=11 // pred_fallthru
          _
        // Predicated region
        $region41: #{forward.1} parent=11 // pred_check
          %p315 = pneg %p211
        $region42: #{forward.1} parent=11 // pred_check_branch
          %317 = sbr.rel (%p315) target = $region44
        $region43: #{forward.1} parent=11 // pred_region
          _
        $region44: #{forward.1} parent=11 // pred_fallthru
          _
        // Predicated region
        $region45: #{forward.1} parent=11 // pred_check
          %p318 = pneg %p232
        $region46: #{forward.1} parent=11 // pred_check_branch
          %320 = sbr.rel (%p318) target = $region48
        $region47: #{forward.1} parent=11 // pred_region
          _
        $region48: #{forward.1} parent=11 // pred_fallthru
          _
        // Predicated region
        $region49: #{forward.1} parent=11 // pred_check
          %p321 = pneg %p253
        $region50: #{forward.1} parent=11 // pred_check_branch
          %323 = sbr.rel (%p321) target = $region52
        $region51: #{forward.1} parent=11 // pred_region
          _
        $region52: #{forward.1} parent=11 // pred_fallthru
          _
      $region12: #{forward.1} parent=5 // pred_fallthru
        _
      %p324 = scmp.lt.s32.totalorder %s17, 3
      // Predicated region
      $region53: #{forward.1} parent=5 // pred_check
        %p325 = pneg %p324
      $region54: #{forward.1} parent=5 // pred_check_branch
        %327 = sbr.rel (%p325) target = $region56
      $region55: #{forward.1} parent=5 // pred_region
        // Predicated region
        $region57: #{forward.1} parent=55 // pred_check
          %p328 = pneg %p37
        $region58: #{forward.1} parent=55 // pred_check_branch
          %330 = sbr.rel (%p328) target = $region60
        $region59: #{forward.1} parent=55 // pred_region
          %s331 = sand.u32 %s27, 1
          %s332 = sand.u32 %s27, 1
          %s333 = smul.addr %s332, 128
          %s334 = scalar_lea.vmem [#allocation5], %s333
          %s335 = smul.addr %s17, 8
          %s336 = scalar_lea.vmem %s0, %s335
          // Predicated region
          $region61: #{forward.1} parent=59 // pred_check
            _
          $region62: #{forward.1} parent=59 // pred_check_branch
            %338 = sbr.rel (0) target = $region64
          $region63: #{forward.1} parent=59 // pred_region
            // Predicated region
            $region65: #{forward.1} parent=63 // pred_check
              _
            $region66: #{forward.1} parent=63 // pred_check_branch
              %340 = sbr.rel (0) target = $region68
            $region67: #{forward.1} parent=63 // pred_region
              // Predicated region
              $region80: #{forward.1} parent=67 // pred_check
                _
              $region81: #{forward.1} parent=67 // pred_check_branch
                %385 = sbr.rel (0) target = $region83
              $region82: #{forward.1} parent=67 // pred_region
                loop: start=0, step=1, limit=1
                $region84: #{forward.1} parent=82 // loop_pre_header
                  _
                $region85: #{forward.1} parent=82 // loop_header
                  %s387 = sphi 0, %s391
                  %p388 = scmp.ge.s32.totalorder %s387, 1
                  %s392 = sphi %s336, %s336
                  %s393 = sphi %s334, %s334
                $region86: #{forward.1} parent=82 // loop_header_branch
                  %390 = sbr.rel (%p388) target = $region90
                $region87: #{forward.1} parent=82 // loop_body
                  %v394 = vld [vmem:[%s392] sm:$0xff]
                  %395 = vst [vmem:[%s393] sm:$0xff] %v394
                  %v396 = vld [vmem:[%s392 + $0x18] sm:$0xff]
                  %397 = vst [vmem:[%s393 + $0x8] sm:$0xff] %v396
                  %v398 = vld [vmem:[%s392 + $0x30] sm:$0xff]
                  %399 = vst [vmem:[%s393 + $0x10] sm:$0xff] %v398
                  %v400 = vld [vmem:[%s392 + $0x48] sm:$0xff]
                  %401 = vst [vmem:[%s393 + $0x18] sm:$0xff] %v400
                  %v402 = vld [vmem:[%s392 + $0x60] sm:$0xff]
                  %403 = vst [vmem:[%s393 + $0x20] sm:$0xff] %v402
                  %v404 = vld [vmem:[%s392 + $0x78] sm:$0xff]
                  %405 = vst [vmem:[%s393 + $0x28] sm:$0xff] %v404
                  %v406 = vld [vmem:[%s392 + $0x90] sm:$0xff]
                  %407 = vst [vmem:[%s393 + $0x30] sm:$0xff] %v406
                  %v408 = vld [vmem:[%s392 + $0xa8] sm:$0xff]
                  %409 = vst [vmem:[%s393 + $0x38] sm:$0xff] %v408
                  %v410 = vld [vmem:[%s392 + $0xc0] sm:$0xff]
                  %411 = vst [vmem:[%s393 + $0x40] sm:$0xff] %v410
                  %v412 = vld [vmem:[%s392 + $0xd8] sm:$0xff]
                  %413 = vst [vmem:[%s393 + $0x48] sm:$0xff] %v412
                  %v414 = vld [vmem:[%s392 + $0xf0] sm:$0xff]
                  %415 = vst [vmem:[%s393 + $0x50] sm:$0xff] %v414
                  %v416 = vld [vmem:[%s392 + $0x108] sm:$0xff]
                  %417 = vst [vmem:[%s393 + $0x58] sm:$0xff] %v416
                  %v418 = vld [vmem:[%s392 + $0x120] sm:$0xff]
                  %419 = vst [vmem:[%s393 + $0x60] sm:$0xff] %v418
                  %v420 = vld [vmem:[%s392 + $0x138] sm:$0xff]
                  %421 = vst [vmem:[%s393 + $0x68] sm:$0xff] %v420
                  %v422 = vld [vmem:[%s392 + $0x150] sm:$0xff]
                  %423 = vst [vmem:[%s393 + $0x70] sm:$0xff] %v422
                  %v424 = vld [vmem:[%s392 + $0x168] sm:$0xff]
                  %425 = vst [vmem:[%s393 + $0x78] sm:$0xff] %v424
                $region88: #{forward.1} parent=82 // loop_footer
                  %s391 = sadd.s32 1, %s387
                $region89: #{forward.1} parent=82 // loop_footer_branch
                  %386 = sbr.rel target = $region85
                $region90: #{forward.1} parent=82 // loop_exit
                  _
              $region83: #{forward.1} parent=67 // pred_fallthru
                _
              // Predicated region
              $region91: #{forward.1} parent=67 // pred_check
                _
              $region92: #{forward.1} parent=67 // pred_check_branch
                %427 = sbr.rel target = $region94
              $region93: #{forward.1} parent=67 // pred_region
                _
              $region94: #{forward.1} parent=67 // pred_fallthru
                _
            $region68: #{forward.1} parent=63 // pred_fallthru
              _
            // Predicated region
            $region69: #{forward.1} parent=63 // pred_check
              _
            $region70: #{forward.1} parent=63 // pred_check_branch
              %342 = sbr.rel target = $region72
            $region71: #{forward.1} parent=63 // pred_region
              loop: start=0, step=1, limit=1
              $region73: #{forward.1} parent=71 // loop_pre_header
                _
              $region74: #{forward.1} parent=71 // loop_header
                %s345 = sphi 0, %s349
                %p346 = scmp.ge.s32.totalorder %s345, 1
                %s350 = sphi %s336, %s336
                %s351 = sphi %s334, %s334
              $region75: #{forward.1} parent=71 // loop_header_branch
                %348 = sbr.rel (%p346) target = $region79
              $region76: #{forward.1} parent=71 // loop_body
                %v352 = vld [vmem:[%s350] sm:$0xff]
                %353 = vst [vmem:[%s351] sm:$0xff] %v352
                %v354 = vld [vmem:[%s350 + $0x18] sm:$0xff]
                %355 = vst [vmem:[%s351 + $0x8] sm:$0xff] %v354
                %v356 = vld [vmem:[%s350 + $0x30] sm:$0xff]
                %357 = vst [vmem:[%s351 + $0x10] sm:$0xff] %v356
                %v358 = vld [vmem:[%s350 + $0x48] sm:$0xff]
                %359 = vst [vmem:[%s351 + $0x18] sm:$0xff] %v358
                %v360 = vld [vmem:[%s350 + $0x60] sm:$0xff]
                %361 = vst [vmem:[%s351 + $0x20] sm:$0xff] %v360
                %v362 = vld [vmem:[%s350 + $0x78] sm:$0xff]
                %363 = vst [vmem:[%s351 + $0x28] sm:$0xff] %v362
                %v364 = vld [vmem:[%s350 + $0x90] sm:$0xff]
                %365 = vst [vmem:[%s351 + $0x30] sm:$0xff] %v364
                %v366 = vld [vmem:[%s350 + $0xa8] sm:$0xff]
                %367 = vst [vmem:[%s351 + $0x38] sm:$0xff] %v366
                %v368 = vld [vmem:[%s350 + $0xc0] sm:$0xff]
                %369 = vst [vmem:[%s351 + $0x40] sm:$0xff] %v368
                %v370 = vld [vmem:[%s350 + $0xd8] sm:$0xff]
                %371 = vst [vmem:[%s351 + $0x48] sm:$0xff] %v370
                %v372 = vld [vmem:[%s350 + $0xf0] sm:$0xff]
                %373 = vst [vmem:[%s351 + $0x50] sm:$0xff] %v372
                %v374 = vld [vmem:[%s350 + $0x108] sm:$0xff]
                %375 = vst [vmem:[%s351 + $0x58] sm:$0xff] %v374
                %v376 = vld [vmem:[%s350 + $0x120] sm:$0xff]
                %377 = vst [vmem:[%s351 + $0x60] sm:$0xff] %v376
                %v378 = vld [vmem:[%s350 + $0x138] sm:$0xff]
                %379 = vst [vmem:[%s351 + $0x68] sm:$0xff] %v378
                %v380 = vld [vmem:[%s350 + $0x150] sm:$0xff]
                %381 = vst [vmem:[%s351 + $0x70] sm:$0xff] %v380
                %v382 = vld [vmem:[%s350 + $0x168] sm:$0xff]
                %383 = vst [vmem:[%s351 + $0x78] sm:$0xff] %v382
              $region77: #{forward.1} parent=71 // loop_footer
                %s349 = sadd.s32 1, %s345
              $region78: #{forward.1} parent=71 // loop_footer_branch
                %344 = sbr.rel target = $region74
              $region79: #{forward.1} parent=71 // loop_exit
                _
            $region72: #{forward.1} parent=63 // pred_fallthru
              _
          $region64: #{forward.1} parent=59 // pred_fallthru
            _
          %428 = vnop
        $region60: #{forward.1} parent=55 // pred_fallthru
          _
      $region56: #{forward.1} parent=5 // pred_fallthru
        _
      %p429 = scmp.le.s32.totalorder 1, %s17
      %p430 = scmp.lt.s32.totalorder %s17, 4
      %p431 = pnand %p429, %p430
      %p432 = pneg %p431
      // Predicated region
      $region95: #{forward.1} parent=5 // pred_check
        _
      $region96: #{forward.1} parent=5 // pred_check_branch
        %434 = sbr.rel (%p431) target = $region98
      $region97: #{forward.1} parent=5 // pred_region
        %s435 = ssub.s32 %s17, 1
        %s436 = sand.u32 %s30, 1
        %s437 = sand.u32 %s30, 1
        %s438 = smul.addr %s437, 128
        %s439 = scalar_lea.vmem [#allocation5], %s438
        // Predicated region
        $region99: #{forward.1} parent=97 // pred_check
          %p440 = pneg %p43
        $region100: #{forward.1} parent=97 // pred_check_branch
          %442 = sbr.rel (%p440) target = $region102
        $region101: #{forward.1} parent=97 // pred_region
          _
        $region102: #{forward.1} parent=97 // pred_fallthru
          _
        %s443 = sand.u32 %s30, 1
        %s444 = sand.u32 %s30, 1
        %s445 = smul.addr %s444, 128
        %s446 = scalar_lea.vmem [#allocation5], %s445
        %p447 = pneg %p43
        %p448 = pneg %p40
        %p449 = pneg %p64
        %p450 = pneg %p61
        %p451 = pneg %p85
        %p452 = pneg %p82
        %p453 = pneg %p106
        %p454 = pneg %p103
        %p455 = pneg %p127
        %p456 = pneg %p124
        %p457 = pneg %p148
        %p458 = pneg %p145
        %p459 = pneg %p169
        %p460 = pneg %p166
        %p461 = pneg %p190
        %p462 = pneg %p187
        %p463 = pneg %p211
        %p464 = pneg %p208
        %p465 = pneg %p232
        %p466 = pneg %p229
        %p467 = pneg %p253
        %p468 = pneg %p250
        %p469 = pneg %p279
        %p470 = pneg %p276
        %p471 = scmp.lt.s32.totalorder %s22, 2
        %s472 = scalar_select %p471, %s22, 2
        %s473 = smul.addr %s472, 8
        %s474 = scalar_lea.vmem %s11, %s473
        %p475 = scmp.lt.s32.totalorder %s22, 2
        %s476 = scalar_select %p475, %s22, 2
        %s477 = smul.addr %s476, 8
        %s478 = scalar_lea.vmem %s11, %s477
        %479 = vst [vmem:[#allocation2] sm:$0xff] 0.0
        %480 = vst [vmem:[#allocation2 + $0x8] sm:$0xff] 0.0
        %vm481 = vcmask 113664
        %482 = vst.msk [vmem:[#allocation2 + $0x10] sm:$0xff] %vm481, 0.0
        %483 = vst [vmem:[#allocation2 + $0x18] sm:$0xff] 0.0
        %484 = vst [vmem:[#allocation2 + $0x20] sm:$0xff] 0.0
        %485 = vst.msk [vmem:[#allocation2 + $0x28] sm:$0xff] %vm481, 0.0
        %486 = vst [vmem:[#allocation2 + $0x30] sm:$0xff] 0.0
        %487 = vst [vmem:[#allocation2 + $0x38] sm:$0xff] 0.0
        %488 = vst.msk [vmem:[#allocation2 + $0x40] sm:$0xff] %vm481, 0.0
        %489 = vst [vmem:[#allocation2 + $0x48] sm:$0xff] 0.0
        %490 = vst [vmem:[#allocation2 + $0x50] sm:$0xff] 0.0
        %491 = vst.msk [vmem:[#allocation2 + $0x58] sm:$0xff] %vm481, 0.0
        %492 = vst [vmem:[#allocation2 + $0x60] sm:$0xff] 0.0
        %493 = vst [vmem:[#allocation2 + $0x68] sm:$0xff] 0.0
        %494 = vst.msk [vmem:[#allocation2 + $0x70] sm:$0xff] %vm481, 0.0
        %495 = vst [vmem:[#allocation2 + $0x78] sm:$0xff] 0.0
        %496 = vst [vmem:[#allocation2 + $0x80] sm:$0xff] 0.0
        %497 = vst.msk [vmem:[#allocation2 + $0x88] sm:$0xff] %vm481, 0.0
        %498 = vst [vmem:[#allocation2 + $0x90] sm:$0xff] 0.0
        %499 = vst [vmem:[#allocation2 + $0x98] sm:$0xff] 0.0
        %500 = vst.msk [vmem:[#allocation2 + $0xa0] sm:$0xff] %vm481, 0.0
        %501 = vst [vmem:[#allocation2 + $0xa8] sm:$0xff] 0.0
        %502 = vst [vmem:[#allocation2 + $0xb0] sm:$0xff] 0.0
        %503 = vst.msk [vmem:[#allocation2 + $0xb8] sm:$0xff] %vm481, 0.0
        %504 = vst [vmem:[#allocation2 + $0xc0] sm:$0xff] 0.0
        %505 = vst [vmem:[#allocation2 + $0xc8] sm:$0xff] 0.0
        %506 = vst.msk [vmem:[#allocation2 + $0xd0] sm:$0xff] %vm481, 0.0
        %507 = vst [vmem:[#allocation2 + $0xd8] sm:$0xff] 0.0
        %508 = vst [vmem:[#allocation2 + $0xe0] sm:$0xff] 0.0
        %509 = vst.msk [vmem:[#allocation2 + $0xe8] sm:$0xff] %vm481, 0.0
        %510 = vst [vmem:[#allocation2 + $0xf0] sm:$0xff] 0.0
        %511 = vst [vmem:[#allocation2 + $0xf8] sm:$0xff] 0.0
        %512 = vst.msk [vmem:[#allocation2 + $0x100] sm:$0xff] %vm481, 0.0
        %513 = vst [vmem:[#allocation2 + $0x108] sm:$0xff] 0.0
        %514 = vst [vmem:[#allocation2 + $0x110] sm:$0xff] 0.0
        %515 = vst.msk [vmem:[#allocation2 + $0x118] sm:$0xff] %vm481, 0.0
        %516 = vst [vmem:[#allocation2 + $0x120] sm:$0xff] 0.0
        %517 = vst [vmem:[#allocation2 + $0x128] sm:$0xff] 0.0
        %518 = vst.msk [vmem:[#allocation2 + $0x130] sm:$0xff] %vm481, 0.0
        %519 = vst [vmem:[#allocation2 + $0x138] sm:$0xff] 0.0
        %520 = vst [vmem:[#allocation2 + $0x140] sm:$0xff] 0.0
        %521 = vst.msk [vmem:[#allocation2 + $0x148] sm:$0xff] %vm481, 0.0
        %522 = vst [vmem:[#allocation3] sm:$0xff] 0.0
        %523 = vst [vmem:[#allocation3 + $0x8] sm:$0xff] 0.0
        %524 = vst.msk [vmem:[#allocation3 + $0x10] sm:$0xff] %vm481, 0.0
        %525 = vst [vmem:[#allocation3 + $0x18] sm:$0xff] 0.0
        %526 = vst [vmem:[#allocation3 + $0x20] sm:$0xff] 0.0
        %527 = vst.msk [vmem:[#allocation3 + $0x28] sm:$0xff] %vm481, 0.0
        %528 = vst [vmem:[#allocation3 + $0x30] sm:$0xff] 0.0
        %529 = vst [vmem:[#allocation3 + $0x38] sm:$0xff] 0.0
        %530 = vst.msk [vmem:[#allocation3 + $0x40] sm:$0xff] %vm481, 0.0
        %531 = vst [vmem:[#allocation3 + $0x48] sm:$0xff] 0.0
        %532 = vst [vmem:[#allocation3 + $0x50] sm:$0xff] 0.0
        %533 = vst.msk [vmem:[#allocation3 + $0x58] sm:$0xff] %vm481, 0.0
        %534 = vst [vmem:[#allocation3 + $0x60] sm:$0xff] 0.0
        %535 = vst [vmem:[#allocation3 + $0x68] sm:$0xff] 0.0
        %536 = vst.msk [vmem:[#allocation3 + $0x70] sm:$0xff] %vm481, 0.0
        %537 = vst [vmem:[#allocation4] sm:$0xff] 0.0
        %v538 = vld [vmem:[%s439] sm:$0xff]
        %v539 = vld [vmem:[%s439 + $0x8] sm:$0xff]
        %v540 = vld [vmem:[%s439 + $0x10] sm:$0xff]
        %v541 = vld [vmem:[%s439 + $0x18] sm:$0xff]
        %v542 = vld [vmem:[%s439 + $0x20] sm:$0xff]
        %v543 = vld [vmem:[%s439 + $0x28] sm:$0xff]
        %v544 = vld [vmem:[%s439 + $0x30] sm:$0xff]
        %v545 = vld [vmem:[%s439 + $0x38] sm:$0xff]
        %v546 = vld [vmem:[%s439 + $0x40] sm:$0xff]
        %v547 = vld [vmem:[%s439 + $0x48] sm:$0xff]
        %v548 = vld [vmem:[%s439 + $0x50] sm:$0xff]
        %v549 = vld [vmem:[%s439 + $0x58] sm:$0xff]
        %v550 = vld [vmem:[%s439 + $0x60] sm:$0xff]
        %v551 = vld [vmem:[%s439 + $0x68] sm:$0xff]
        %v552 = vld [vmem:[%s439 + $0x70] sm:$0xff]
        %v553 = vld [vmem:[%s439 + $0x78] sm:$0xff]
        %567 = vrot.lane.b32.xlu0 %v538, 3
        %v568 = vpop.permute.xlu0 %567
        %569 = vrot.lane.b32.xlu0 %v539, 3
        %v570 = vpop.permute.xlu0 %569
        %571 = vrot.lane.b32.xlu0 %v540, 3
        %v572 = vpop.permute.xlu0 %571
        %573 = vrot.lane.b32.xlu0 %v541, 3
        %v574 = vpop.permute.xlu0 %573
        %575 = vrot.lane.b32.xlu0 %v542, 3
        %v576 = vpop.permute.xlu0 %575
        %577 = vrot.lane.b32.xlu0 %v543, 3
        %v578 = vpop.permute.xlu0 %577
        %579 = vrot.lane.b32.xlu0 %v544, 3
        %v580 = vpop.permute.xlu0 %579
        %581 = vrot.lane.b32.xlu0 %v545, 3
        %v582 = vpop.permute.xlu0 %581
        %583 = vrot.lane.b32.xlu0 %v546, 3
        %v584 = vpop.permute.xlu0 %583
        %585 = vrot.lane.b32.xlu0 %v547, 3
        %v586 = vpop.permute.xlu0 %585
        %587 = vrot.lane.b32.xlu0 %v548, 3
        %v588 = vpop.permute.xlu0 %587
        %589 = vrot.lane.b32.xlu0 %v549, 3
        %v590 = vpop.permute.xlu0 %589
        %591 = vrot.lane.b32.xlu0 %v550, 3
        %v592 = vpop.permute.xlu0 %591
        %s606 = scalar_lea.vmem [#allocation2], 24
        %vm607 = vcmask 416792
        %608 = vst.msk [vmem:[%s606] sm:$0xff] %vm607, %v568
        %609 = vst.msk [vmem:[%s606 + $0x18] sm:$0xff] %vm607, %v570
        %610 = vst.msk [vmem:[%s606 + $0x30] sm:$0xff] %vm607, %v572
        %611 = vst.msk [vmem:[%s606 + $0x48] sm:$0xff] %vm607, %v574
        %612 = vst.msk [vmem:[%s606 + $0x60] sm:$0xff] %vm607, %v576
        %613 = vst.msk [vmem:[%s606 + $0x78] sm:$0xff] %vm607, %v578
        %614 = vst.msk [vmem:[%s606 + $0x90] sm:$0xff] %vm607, %v580
        %615 = vst.msk [vmem:[%s606 + $0xa8] sm:$0xff] %vm607, %v582
        %616 = vst.msk [vmem:[%s606 + $0xc0] sm:$0xff] %vm607, %v584
        %617 = vst.msk [vmem:[%s606 + $0xd8] sm:$0xff] %vm607, %v586
        %618 = vst.msk [vmem:[%s606 + $0xf0] sm:$0xff] %vm607, %v588
        %619 = vst.msk [vmem:[%s606 + $0x108] sm:$0xff] %vm607, %v590
        %620 = vst.msk [vmem:[%s606 + $0x120] sm:$0xff] %vm607, %v592
        %622 = vrot.lane.b32.xlu0 %v538, 57
        %v623 = vpop.permute.xlu0 %622
        %624 = vrot.lane.b32.xlu0 %v539, 57
        %v625 = vpop.permute.xlu0 %624
        %626 = vrot.lane.b32.xlu0 %v540, 57
        %v627 = vpop.permute.xlu0 %626
        %628 = vrot.lane.b32.xlu0 %v541, 57
        %v629 = vpop.permute.xlu0 %628
        %630 = vrot.lane.b32.xlu0 %v542, 57
        %v631 = vpop.permute.xlu0 %630
        %632 = vrot.lane.b32.xlu0 %v543, 57
        %v633 = vpop.permute.xlu0 %632
        %634 = vrot.lane.b32.xlu0 %v544, 57
        %v635 = vpop.permute.xlu0 %634
        %636 = vrot.lane.b32.xlu0 %v545, 57
        %v637 = vpop.permute.xlu0 %636
        %638 = vrot.lane.b32.xlu0 %v546, 57
        %v639 = vpop.permute.xlu0 %638
        %640 = vrot.lane.b32.xlu0 %v547, 57
        %v641 = vpop.permute.xlu0 %640
        %642 = vrot.lane.b32.xlu0 %v548, 57
        %v643 = vpop.permute.xlu0 %642
        %644 = vrot.lane.b32.xlu0 %v549, 57
        %v645 = vpop.permute.xlu0 %644
        %646 = vrot.lane.b32.xlu0 %v550, 57
        %v647 = vpop.permute.xlu0 %646
        %648 = vrot.lane.b32.xlu0 %v551, 57
        %v649 = vpop.permute.xlu0 %648
        %vm664 = vcmask 859592
        %665 = vst.msk [vmem:[#allocation2] sm:$0xff] %vm664, %v623
        %666 = vst.msk [vmem:[#allocation2 + $0x18] sm:$0xff] %vm664, %v625
        %667 = vst.msk [vmem:[#allocation2 + $0x30] sm:$0xff] %vm664, %v627
        %668 = vst.msk [vmem:[#allocation2 + $0x48] sm:$0xff] %vm664, %v629
        %669 = vst.msk [vmem:[#allocation2 + $0x60] sm:$0xff] %vm664, %v631
        %670 = vst.msk [vmem:[#allocation2 + $0x78] sm:$0xff] %vm664, %v633
        %671 = vst.msk [vmem:[#allocation2 + $0x90] sm:$0xff] %vm664, %v635
        %672 = vst.msk [vmem:[#allocation2 + $0xa8] sm:$0xff] %vm664, %v637
        %673 = vst.msk [vmem:[#allocation2 + $0xc0] sm:$0xff] %vm664, %v639
        %674 = vst.msk [vmem:[#allocation2 + $0xd8] sm:$0xff] %vm664, %v641
        %675 = vst.msk [vmem:[#allocation2 + $0xf0] sm:$0xff] %vm664, %v643
        %676 = vst.msk [vmem:[#allocation2 + $0x108] sm:$0xff] %vm664, %v645
        %677 = vst.msk [vmem:[#allocation2 + $0x120] sm:$0xff] %vm664, %v647
        %678 = vst.msk [vmem:[#allocation2 + $0x138] sm:$0xff] %vm664, %v649
        %680 = vrot.lane.b32.xlu0 %v539, 111
        %v681 = vpop.permute.xlu0 %680
        %682 = vrot.lane.b32.xlu0 %v540, 111
        %v683 = vpop.permute.xlu0 %682
        %684 = vrot.lane.b32.xlu0 %v541, 111
        %v685 = vpop.permute.xlu0 %684
        %686 = vrot.lane.b32.xlu0 %v542, 111
        %v687 = vpop.permute.xlu0 %686
        %688 = vrot.lane.b32.xlu0 %v543, 111
        %v689 = vpop.permute.xlu0 %688
        %690 = vrot.lane.b32.xlu0 %v544, 111
        %v691 = vpop.permute.xlu0 %690
        %692 = vrot.lane.b32.xlu0 %v545, 111
        %v693 = vpop.permute.xlu0 %692
        %694 = vrot.lane.b32.xlu0 %v546, 111
        %v695 = vpop.permute.xlu0 %694
        %696 = vrot.lane.b32.xlu0 %v547, 111
        %v697 = vpop.permute.xlu0 %696
        %698 = vrot.lane.b32.xlu0 %v548, 111
        %v699 = vpop.permute.xlu0 %698
        %700 = vrot.lane.b32.xlu0 %v549, 111
        %v701 = vpop.permute.xlu0 %700
        %702 = vrot.lane.b32.xlu0 %v550, 111
        %v703 = vpop.permute.xlu0 %702
        %704 = vrot.lane.b32.xlu0 %v551, 111
        %v705 = vpop.permute.xlu0 %704
        %706 = vrot.lane.b32.xlu0 %v552, 111
        %v707 = vpop.permute.xlu0 %706
        %vm722 = vcmask 1048440
        %723 = vst.msk [vmem:[#allocation2] sm:$0xff] %vm722, %v681
        %vm724 = vcmask 252928
        %725 = vst.msk [vmem:[#allocation2 + $0x8] sm:$0xff] %vm724, %v681
        %726 = vst.msk [vmem:[#allocation2 + $0x18] sm:$0xff] %vm722, %v683
        %727 = vst.msk [vmem:[#allocation2 + $0x20] sm:$0xff] %vm724, %v683
        %728 = vst.msk [vmem:[#allocation2 + $0x30] sm:$0xff] %vm722, %v685
        %729 = vst.msk [vmem:[#allocation2 + $0x38] sm:$0xff] %vm724, %v685
        %730 = vst.msk [vmem:[#allocation2 + $0x48] sm:$0xff] %vm722, %v687
        %731 = vst.msk [vmem:[#allocation2 + $0x50] sm:$0xff] %vm724, %v687
        %732 = vst.msk [vmem:[#allocation2 + $0x60] sm:$0xff] %vm722, %v689
        %733 = vst.msk [vmem:[#allocation2 + $0x68] sm:$0xff] %vm724, %v689
        %734 = vst.msk [vmem:[#allocation2 + $0x78] sm:$0xff] %vm722, %v691
        %735 = vst.msk [vmem:[#allocation2 + $0x80] sm:$0xff] %vm724, %v691
        %736 = vst.msk [vmem:[#allocation2 + $0x90] sm:$0xff] %vm722, %v693
        %737 = vst.msk [vmem:[#allocation2 + $0x98] sm:$0xff] %vm724, %v693
        %738 = vst.msk [vmem:[#allocation2 + $0xa8] sm:$0xff] %vm722, %v695
        %739 = vst.msk [vmem:[#allocation2 + $0xb0] sm:$0xff] %vm724, %v695
        %740 = vst.msk [vmem:[#allocation2 + $0xc0] sm:$0xff] %vm722, %v697
        %741 = vst.msk [vmem:[#allocation2 + $0xc8] sm:$0xff] %vm724, %v697
        %742 = vst.msk [vmem:[#allocation2 + $0xd8] sm:$0xff] %vm722, %v699
        %743 = vst.msk [vmem:[#allocation2 + $0xe0] sm:$0xff] %vm724, %v699
        %744 = vst.msk [vmem:[#allocation2 + $0xf0] sm:$0xff] %vm722, %v701
        %745 = vst.msk [vmem:[#allocation2 + $0xf8] sm:$0xff] %vm724, %v701
        %746 = vst.msk [vmem:[#allocation2 + $0x108] sm:$0xff] %vm722, %v703
        %747 = vst.msk [vmem:[#allocation2 + $0x110] sm:$0xff] %vm724, %v703
        %748 = vst.msk [vmem:[#allocation2 + $0x120] sm:$0xff] %vm722, %v705
        %749 = vst.msk [vmem:[#allocation2 + $0x128] sm:$0xff] %vm724, %v705
        %750 = vst.msk [vmem:[#allocation2 + $0x138] sm:$0xff] %vm722, %v707
        %751 = vst.msk [vmem:[#allocation2 + $0x140] sm:$0xff] %vm724, %v707
        %753 = vrot.lane.b32.xlu0 %v540, 37
        %v754 = vpop.permute.xlu0 %753
        %755 = vrot.lane.b32.xlu0 %v541, 37
        %v756 = vpop.permute.xlu0 %755
        %757 = vrot.lane.b32.xlu0 %v542, 37
        %v758 = vpop.permute.xlu0 %757
        %759 = vrot.lane.b32.xlu0 %v543, 37
        %v760 = vpop.permute.xlu0 %759
        %761 = vrot.lane.b32.xlu0 %v544, 37
        %v762 = vpop.permute.xlu0 %761
        %763 = vrot.lane.b32.xlu0 %v545, 37
        %v764 = vpop.permute.xlu0 %763
        %765 = vrot.lane.b32.xlu0 %v546, 37
        %v766 = vpop.permute.xlu0 %765
        %767 = vrot.lane.b32.xlu0 %v547, 37
        %v768 = vpop.permute.xlu0 %767
        %769 = vrot.lane.b32.xlu0 %v548, 37
        %v770 = vpop.permute.xlu0 %769
        %771 = vrot.lane.b32.xlu0 %v549, 37
        %v772 = vpop.permute.xlu0 %771
        %773 = vrot.lane.b32.xlu0 %v550, 37
        %v774 = vpop.permute.xlu0 %773
        %775 = vrot.lane.b32.xlu0 %v551, 37
        %v776 = vpop.permute.xlu0 %775
        %777 = vrot.lane.b32.xlu0 %v552, 37
        %v778 = vpop.permute.xlu0 %777
        %779 = vrot.lane.b32.xlu0 %v553, 37
        %v780 = vpop.permute.xlu0 %779
        %vm795 = vcmask 695592
        %796 = vst.msk [vmem:[#allocation2 + $0x8] sm:$0xff] %vm795, %v754
        %797 = vst.msk [vmem:[#allocation2 + $0x20] sm:$0xff] %vm795, %v756
        %798 = vst.msk [vmem:[#allocation2 + $0x38] sm:$0xff] %vm795, %v758
        %799 = vst.msk [vmem:[#allocation2 + $0x50] sm:$0xff] %vm795, %v760
        %800 = vst.msk [vmem:[#allocation2 + $0x68] sm:$0xff] %vm795, %v762
        %801 = vst.msk [vmem:[#allocation2 + $0x80] sm:$0xff] %vm795, %v764
        %802 = vst.msk [vmem:[#allocation2 + $0x98] sm:$0xff] %vm795, %v766
        %803 = vst.msk [vmem:[#allocation2 + $0xb0] sm:$0xff] %vm795, %v768
        %804 = vst.msk [vmem:[#allocation2 + $0xc8] sm:$0xff] %vm795, %v770
        %805 = vst.msk [vmem:[#allocation2 + $0xe0] sm:$0xff] %vm795, %v772
        %806 = vst.msk [vmem:[#allocation2 + $0xf8] sm:$0xff] %vm795, %v774
        %807 = vst.msk [vmem:[#allocation2 + $0x110] sm:$0xff] %vm795, %v776
        %808 = vst.msk [vmem:[#allocation2 + $0x128] sm:$0xff] %vm795, %v778
        %809 = vst.msk [vmem:[#allocation2 + $0x140] sm:$0xff] %vm795, %v780
        %810 = vrot.lane.b32.xlu0 %v541, 91
        %v811 = vpop.permute.xlu0 %810
        %812 = vrot.lane.b32.xlu0 %v542, 91
        %v813 = vpop.permute.xlu0 %812
        %814 = vrot.lane.b32.xlu0 %v543, 91
        %v815 = vpop.permute.xlu0 %814
        %816 = vrot.lane.b32.xlu0 %v544, 91
        %v817 = vpop.permute.xlu0 %816
        %818 = vrot.lane.b32.xlu0 %v545, 91
        %v819 = vpop.permute.xlu0 %818
        %820 = vrot.lane.b32.xlu0 %v546, 91
        %v821 = vpop.permute.xlu0 %820
        %822 = vrot.lane.b32.xlu0 %v547, 91
        %v823 = vpop.permute.xlu0 %822
        %824 = vrot.lane.b32.xlu0 %v548, 91
        %v825 = vpop.permute.xlu0 %824
        %826 = vrot.lane.b32.xlu0 %v549, 91
        %v827 = vpop.permute.xlu0 %826
        %828 = vrot.lane.b32.xlu0 %v550, 91
        %v829 = vpop.permute.xlu0 %828
        %830 = vrot.lane.b32.xlu0 %v551, 91
        %v831 = vpop.permute.xlu0 %830
        %832 = vrot.lane.b32.xlu0 %v552, 91
        %v833 = vpop.permute.xlu0 %832
        %834 = vrot.lane.b32.xlu0 %v553, 91
        %v835 = vpop.permute.xlu0 %834
        %vm849 = vcmask 1048280
        %850 = vst.msk [vmem:[#allocation2 + $0x8] sm:$0xff] %vm849, %v811
        %vm851 = vcmask 89088
        %852 = vst.msk [vmem:[#allocation2 + $0x10] sm:$0xff] %vm851, %v811
        %853 = vst.msk [vmem:[#allocation2 + $0x20] sm:$0xff] %vm849, %v813
        %854 = vst.msk [vmem:[#allocation2 + $0x28] sm:$0xff] %vm851, %v813
        %855 = vst.msk [vmem:[#allocation2 + $0x38] sm:$0xff] %vm849, %v815
        %856 = vst.msk [vmem:[#allocation2 + $0x40] sm:$0xff] %vm851, %v815
        %857 = vst.msk [vmem:[#allocation2 + $0x50] sm:$0xff] %vm849, %v817
        %858 = vst.msk [vmem:[#allocation2 + $0x58] sm:$0xff] %vm851, %v817
        %859 = vst.msk [vmem:[#allocation2 + $0x68] sm:$0xff] %vm849, %v819
        %860 = vst.msk [vmem:[#allocation2 + $0x70] sm:$0xff] %vm851, %v819
        %861 = vst.msk [vmem:[#allocation2 + $0x80] sm:$0xff] %vm849, %v821
        %862 = vst.msk [vmem:[#allocation2 + $0x88] sm:$0xff] %vm851, %v821
        %863 = vst.msk [vmem:[#allocation2 + $0x98] sm:$0xff] %vm849, %v823
        %864 = vst.msk [vmem:[#allocation2 + $0xa0] sm:$0xff] %vm851, %v823
        %865 = vst.msk [vmem:[#allocation2 + $0xb0] sm:$0xff] %vm849, %v825
        %866 = vst.msk [vmem:[#allocation2 + $0xb8] sm:$0xff] %vm851, %v825
        %867 = vst.msk [vmem:[#allocation2 + $0xc8] sm:$0xff] %vm849, %v827
        %868 = vst.msk [vmem:[#allocation2 + $0xd0] sm:$0xff] %vm851, %v827
        %869 = vst.msk [vmem:[#allocation2 + $0xe0] sm:$0xff] %vm849, %v829
        %870 = vst.msk [vmem:[#allocation2 + $0xe8] sm:$0xff] %vm851, %v829
        %871 = vst.msk [vmem:[#allocation2 + $0xf8] sm:$0xff] %vm849, %v831
        %872 = vst.msk [vmem:[#allocation2 + $0x100] sm:$0xff] %vm851, %v831
        %873 = vst.msk [vmem:[#allocation2 + $0x110] sm:$0xff] %vm849, %v833
        %874 = vst.msk [vmem:[#allocation2 + $0x118] sm:$0xff] %vm851, %v833
        %875 = vst.msk [vmem:[#allocation2 + $0x128] sm:$0xff] %vm849, %v835
        %876 = vst.msk [vmem:[#allocation2 + $0x130] sm:$0xff] %vm851, %v835
        %v877 = vld [vmem:[#allocation2] sm:$0xff]
        %v878 = vld [vmem:[#allocation2 + $0x8] sm:$0xff]
        %v879 = vld [vmem:[#allocation2 + $0x10] sm:$0xff]
        %v880 = vld [vmem:[#allocation2 + $0x18] sm:$0xff]
        %v881 = vld [vmem:[#allocation2 + $0x20] sm:$0xff]
        %v882 = vld [vmem:[#allocation2 + $0x28] sm:$0xff]
        %v883 = vld [vmem:[#allocation2 + $0x30] sm:$0xff]
        %v884 = vld [vmem:[#allocation2 + $0x38] sm:$0xff]
        %v885 = vld [vmem:[#allocation2 + $0x40] sm:$0xff]
        %v886 = vld [vmem:[#allocation2 + $0x48] sm:$0xff]
        %v887 = vld [vmem:[#allocation2 + $0x50] sm:$0xff]
        %v888 = vld [vmem:[#allocation2 + $0x58] sm:$0xff]
        %v889 = vld [vmem:[#allocation2 + $0x60] sm:$0xff]
        %v890 = vld [vmem:[#allocation2 + $0x68] sm:$0xff]
        %v891 = vld [vmem:[#allocation2 + $0x70] sm:$0xff]
        %v892 = vld [vmem:[#allocation2 + $0x78] sm:$0xff]
        %v893 = vld [vmem:[#allocation2 + $0x80] sm:$0xff]
        %v894 = vld [vmem:[#allocation2 + $0x88] sm:$0xff]
        %v895 = vld [vmem:[#allocation2 + $0x90] sm:$0xff]
        %v896 = vld [vmem:[#allocation2 + $0x98] sm:$0xff]
        %v897 = vld [vmem:[#allocation2 + $0xa0] sm:$0xff]
        %v898 = vld [vmem:[#allocation2 + $0xa8] sm:$0xff]
        %v899 = vld [vmem:[#allocation2 + $0xb0] sm:$0xff]
        %v900 = vld [vmem:[#allocation2 + $0xb8] sm:$0xff]
        %v901 = vld [vmem:[#allocation2 + $0xc0] sm:$0xff]
        %v902 = vld [vmem:[#allocation2 + $0xc8] sm:$0xff]
        %v903 = vld [vmem:[#allocation2 + $0xd0] sm:$0xff]
        %v904 = vld [vmem:[#allocation2 + $0xd8] sm:$0xff]
        %v905 = vld [vmem:[#allocation2 + $0xe0] sm:$0xff]
        %v906 = vld [vmem:[#allocation2 + $0xe8] sm:$0xff]
        %v907 = vld [vmem:[#allocation2 + $0xf0] sm:$0xff]
        %v908 = vld [vmem:[#allocation2 + $0xf8] sm:$0xff]
        %v909 = vld [vmem:[#allocation2 + $0x100] sm:$0xff]
        %v910 = vld [vmem:[#allocation2 + $0x108] sm:$0xff]
        %v911 = vld [vmem:[#allocation2 + $0x110] sm:$0xff]
        %v912 = vld [vmem:[#allocation2 + $0x118] sm:$0xff]
        %v913 = vld [vmem:[#allocation2 + $0x120] sm:$0xff]
        %v914 = vld [vmem:[#allocation2 + $0x128] sm:$0xff]
        %v915 = vld [vmem:[#allocation2 + $0x130] sm:$0xff]
        %v916 = vld [vmem:[#allocation2 + $0x138] sm:$0xff]
        %v917 = vld [vmem:[#allocation2 + $0x140] sm:$0xff]
        %v918 = vld [vmem:[#allocation2 + $0x148] sm:$0xff]
        %v919 = vld [vmem:[%s1] sm:$0xff]
        %v920 = vld [vmem:[%s1 + $0x8] sm:$0xff]
        %v921 = vld [vmem:[%s1 + $0x10] sm:$0xff]
        %v922 = vld [vmem:[%s1 + $0x18] sm:$0xff]
        %v923 = vld [vmem:[%s1 + $0x20] sm:$0xff]
        %v924 = vld [vmem:[%s1 + $0x28] sm:$0xff]
        %v925 = vld [vmem:[%s1 + $0x30] sm:$0xff]
        %v926 = vld [vmem:[%s1 + $0x38] sm:$0xff]
        %v927 = vld [vmem:[%s1 + $0x40] sm:$0xff]
        %v928 = vld [vmem:[%s1 + $0x48] sm:$0xff]
        %v929 = vld [vmem:[%s1 + $0x50] sm:$0xff]
        %v930 = vld [vmem:[%s1 + $0x58] sm:$0xff]
        %v931 = vld [vmem:[%s1 + $0x60] sm:$0xff]
        %v932 = vld [vmem:[%s1 + $0x68] sm:$0xff]
        %v933 = vld [vmem:[%s1 + $0x70] sm:$0xff]
        %v934 = vld [vmem:[%s1 + $0x78] sm:$0xff]
        %v935 = vld [vmem:[%s1 + $0x80] sm:$0xff]
        %v936 = vld [vmem:[%s1 + $0x88] sm:$0xff]
        %v937 = vld [vmem:[%s1 + $0x90] sm:$0xff]
        %v938 = vld [vmem:[%s1 + $0x98] sm:$0xff]
        %v939 = vld [vmem:[%s1 + $0xa0] sm:$0xff]
        %v940 = vld [vmem:[%s1 + $0xa8] sm:$0xff]
        %v941 = vld [vmem:[%s1 + $0xb0] sm:$0xff]
        %v942 = vld [vmem:[%s1 + $0xb8] sm:$0xff]
        %v943 = vld [vmem:[%s1 + $0xc0] sm:$0xff]
        %v944 = vld [vmem:[%s1 + $0xc8] sm:$0xff]
        %v945 = vld [vmem:[%s1 + $0xd0] sm:$0xff]
        %v946 = vld [vmem:[%s1 + $0xd8] sm:$0xff]
        %v947 = vld [vmem:[%s1 + $0xe0] sm:$0xff]
        %v948 = vld [vmem:[%s1 + $0xe8] sm:$0xff]
        %v949 = vld [vmem:[%s1 + $0xf0] sm:$0xff]
        %v950 = vld [vmem:[%s1 + $0xf8] sm:$0xff]
        %v951 = vld [vmem:[%s1 + $0x100] sm:$0xff]
        %v952 = vld [vmem:[%s1 + $0x108] sm:$0x3f]
        %v953 = vld [vmem:[%s2] sm:$0x1]
        %v955 = vlaneseq
        %v956 = vshrl.u32 %v955, 7
        %v957 = vsub.s32 0, %v956
        %v958 = vrot.slane %v953, %v957
        %v961 = vsel %vm481, %v879, 0
        %v964 = vsel %vm481, %v882, 0
        %v967 = vsel %vm481, %v885, 0
        %v970 = vsel %vm481, %v888, 0
        %v973 = vsel %vm481, %v891, 0
        %v976 = vsel %vm481, %v894, 0
        %v979 = vsel %vm481, %v897, 0
        %v982 = vsel %vm481, %v900, 0
        %v985 = vsel %vm481, %v903, 0
        %v988 = vsel %vm481, %v906, 0
        %v991 = vsel %vm481, %v909, 0
        %v994 = vsel %vm481, %v912, 0
        %v997 = vsel %vm481, %v915, 0
        %v1000 = vsel %vm481, %v918, 0
        %vm1002 = vcmask 1045504
        %v1004 = vsel %vm1002, %v952, 0
        %1006 = vmatprep.subr.mxu0 0.0
        %1007 = vmatpush1.msra.mxu0 %v919
        %1008 = vmatprep.subr.mxu0 0.0
        %1009 = vmatpush1.msra.mxu0 %v920
        %1010 = vmatprep.subr.mxu0 0.0
        %1011 = vmatpush1.msra.mxu0 %v921
        %1012 = vmatprep.subr.mxu0 0.0
        %1013 = vmatpush1.msra.mxu0 %v922
        %1014 = vmatprep.subr.mxu0 0.0
        %1015 = vmatpush1.msra.mxu0 %v923
        %1016 = vmatprep.subr.mxu0 0.0
        %1017 = vmatpush1.msra.mxu0 %v924
        %1018 = vmatprep.subr.mxu0 0.0
        %1019 = vmatpush1.msra.mxu0 %v925
        %1020 = vmatprep.subr.mxu0 0.0
        %1021 = vmatpush1.msra.mxu0 %v926
        %1022 = vmatprep.subr.mxu0 0.0
        %1023 = vmatpush1.msra.mxu0 %v927
        %1024 = vmatprep.subr.mxu0 0.0
        %1025 = vmatpush1.msra.mxu0 %v928
        %1026 = vmatprep.subr.mxu0 0.0
        %1027 = vmatpush1.msra.mxu0 %v929
        %1028 = vmatprep.subr.mxu0 0.0
        %1029 = vmatpush1.msra.mxu0 %v930
        %1030 = vmatprep.subr.mxu0 0.0
        %1031 = vmatpush1.msra.mxu0 %v931
        %1032 = vmatprep.subr.mxu0 0.0
        %1033 = vmatpush1.msra.mxu0 %v932
        %1034 = vmatprep.subr.mxu0 0.0
        %1035 = vmatpush1.msra.mxu0 %v933
        %1036 = vmatprep.subr.mxu0 0.0
        %1037 = vmatpush1.msra.mxu0 %v934
        %1038 = vmatprep.subr.mxu0 0.0
        %1039 = vmatpush1.msra.mxu0 %v935
        %1040 = vmatprep.subr.mxu0 0.0
        %1041 = vmatpush1.msra.mxu0 %v936
        %1042 = vmatprep.subr.mxu0 0.0
        %1043 = vmatpush1.msra.mxu0 %v937
        %1044 = vmatprep.subr.mxu0 0.0
        %1045 = vmatpush1.msra.mxu0 %v938
        %1046 = vmatprep.subr.mxu0 0.0
        %1047 = vmatpush1.msra.mxu0 %v939
        %1048 = vmatprep.subr.mxu0 0.0
        %1049 = vmatpush1.msra.mxu0 %v940
        %1050 = vmatprep.subr.mxu0 0.0
        %1051 = vmatpush1.msra.mxu0 %v941
        %1052 = vmatprep.subr.mxu0 0.0
        %1053 = vmatpush1.msra.mxu0 %v942
        %1054 = vmatprep.subr.mxu0 0.0
        %1055 = vmatpush1.msra.mxu0 %v943
        %1056 = vmatprep.subr.mxu0 0.0
        %1057 = vmatpush1.msra.mxu0 %v944
        %1058 = vmatprep.subr.mxu0 0.0
        %1059 = vmatpush1.msra.mxu0 %v945
        %1060 = vmatprep.subr.mxu0 0.0
        %1061 = vmatpush1.msra.mxu0 %v946
        %1062 = vmatprep.subr.mxu0 0.0
        %1063 = vmatpush1.msra.mxu0 %v947
        %1064 = vmatprep.subr.mxu0 0.0
        %1065 = vmatpush1.msra.mxu0 %v948
        %1066 = vmatprep.subr.mxu0 0.0
        %1067 = vmatpush1.msra.mxu0 %v949
        %1068 = vmatprep.subr.mxu0 0.0
        %1069 = vmatpush1.msra.mxu0 %v950
        %1070 = vmatprep.mubr.f32.mxu0 %v878
        %1071 = vmatmul.mubr.f32.gmra.mrb[0].mxu0 %v877
        %v1072 = vpop.f32.mrb[0].mxu0
        %v1073 = vadd.f32 %v958, %v1072
        %v1074 = vpop.f32.mrb[0].mxu0
        %1075 = vmatprep.mubr.f32.mxu0 %v881
        %1076 = vmatmul.mubr.f32.gmra.mrb[0].mxu0 %v880
        %v1077 = vpop.f32.mrb[0].mxu0
        %v1078 = vadd.f32 %v958, %v1077
        %v1079 = vpop.f32.mrb[0].mxu0
        %1080 = vmatprep.mubr.f32.mxu0 %v884
        %1081 = vmatmul.mubr.f32.gmra.mrb[0].mxu0 %v883
        %v1082 = vpop.f32.mrb[0].mxu0
        %v1083 = vadd.f32 %v958, %v1082
        %v1084 = vpop.f32.mrb[0].mxu0
        %1085 = vmatprep.mubr.f32.mxu0 %v887
        %1086 = vmatmul.mubr.f32.gmra.mrb[0].mxu0 %v886
        %v1087 = vpop.f32.mrb[0].mxu0
        %v1088 = vadd.f32 %v958, %v1087
        %v1089 = vpop.f32.mrb[0].mxu0
        %1090 = vmatprep.mubr.f32.mxu0 %v890
        %1091 = vmatmul.mubr.f32.gmra.mrb[0].mxu0 %v889
        %v1092 = vpop.f32.mrb[0].mxu0
        %v1093 = vadd.f32 %v958, %v1092
        %v1094 = vpop.f32.mrb[0].mxu0
        %1095 = vmatprep.mubr.f32.mxu0 %v893
        %1096 = vmatmul.mubr.f32.gmra.mrb[0].mxu0 %v892
        %v1097 = vpop.f32.mrb[0].mxu0
        %v1098 = vadd.f32 %v958, %v1097
        %v1099 = vpop.f32.mrb[0].mxu0
        %1100 = vmatprep.mubr.f32.mxu0 %v896
        %1101 = vmatmul.mubr.f32.gmra.mrb[0].mxu0 %v895
        %v1102 = vpop.f32.mrb[0].mxu0
        %v1103 = vadd.f32 %v958, %v1102
        %v1104 = vpop.f32.mrb[0].mxu0
        %1105 = vmatprep.mubr.f32.mxu0 %v899
        %1106 = vmatmul.mubr.f32.gmra.mrb[0].mxu0 %v898
        %v1107 = vpop.f32.mrb[0].mxu0
        %v1108 = vadd.f32 %v958, %v1107
        %v1109 = vpop.f32.mrb[0].mxu0
        %1110 = vmatprep.mubr.f32.mxu0 %v902
        %1111 = vmatmul.mubr.f32.gmra.mrb[0].mxu0 %v901
        %v1112 = vpop.f32.mrb[0].mxu0
        %v1113 = vadd.f32 %v958, %v1112
        %v1114 = vpop.f32.mrb[0].mxu0
        %1115 = vmatprep.mubr.f32.mxu0 %v905
        %1116 = vmatmul.mubr.f32.gmra.mrb[0].mxu0 %v904
        %v1117 = vpop.f32.mrb[0].mxu0
        %v1118 = vadd.f32 %v958, %v1117
        %v1119 = vpop.f32.mrb[0].mxu0
        %1120 = vmatprep.mubr.f32.mxu0 %v908
        %1121 = vmatmul.mubr.f32.gmra.mrb[0].mxu0 %v907
        %v1122 = vpop.f32.mrb[0].mxu0
        %v1123 = vadd.f32 %v958, %v1122
        %v1124 = vpop.f32.mrb[0].mxu0
        %1125 = vmatprep.mubr.f32.mxu0 %v911
        %1126 = vmatmul.mubr.f32.gmra.mrb[0].mxu0 %v910
        %v1127 = vpop.f32.mrb[0].mxu0
        %v1128 = vadd.f32 %v958, %v1127
        %v1129 = vpop.f32.mrb[0].mxu0
        %1130 = vmatprep.mubr.f32.mxu0 %v914
        %1131 = vmatmul.mubr.f32.gmra.mrb[0].mxu0 %v913
        %v1132 = vpop.f32.mrb[0].mxu0
        %v1133 = vadd.f32 %v958, %v1132
        %v1134 = vpop.f32.mrb[0].mxu0
        %1135 = vmatprep.mubr.f32.mxu0 %v917
        %1136 = vmatmul.mubr.f32.gmra.mrb[0].mxu0 %v916
        %v1137 = vpop.f32.mrb[0].mxu0
        %v1138 = vadd.f32 %v958, %v1137
        %v1139 = vpop.f32.mrb[0].mxu0
        %1140 = vdwg.mxu0
        %1141 = vmatprep.subr.mxu0 0.0
        %1142 = vmatpush1.msra.mxu0 %v951
        %1143 = vmatprep.subr.mxu0 0.0
        %1144 = vmatpush1.msra.mxu0 %v1004
        %1145 = vmatprep.subr.mxu0 0.0
        %1146 = vmatpush1.msra.mxu0 0.0
        %1147 = vmatprep.subr.mxu0 0.0
        %1148 = vmatpush1.msra.mxu0 0.0
        %1149 = vmatprep.subr.mxu0 0.0
        %1150 = vmatpush1.msra.mxu0 0.0
        %1151 = vmatprep.subr.mxu0 0.0
        %1152 = vmatpush1.msra.mxu0 0.0
        %1153 = vmatprep.subr.mxu0 0.0
        %1154 = vmatpush1.msra.mxu0 0.0
        %1155 = vmatprep.subr.mxu0 0.0
        %1156 = vmatpush1.msra.mxu0 0.0
        %1157 = vmatprep.subr.mxu0 0.0
        %1158 = vmatpush1.msra.mxu0 0.0
        %1159 = vmatprep.subr.mxu0 0.0
        %1160 = vmatpush1.msra.mxu0 0.0
        %1161 = vmatprep.subr.mxu0 0.0
        %1162 = vmatpush1.msra.mxu0 0.0
        %1163 = vmatprep.subr.mxu0 0.0
        %1164 = vmatpush1.msra.mxu0 0.0
        %1165 = vmatprep.subr.mxu0 0.0
        %1166 = vmatpush1.msra.mxu0 0.0
        %1167 = vmatprep.subr.mxu0 0.0
        %1168 = vmatpush1.msra.mxu0 0.0
        %1169 = vmatprep.subr.mxu0 0.0
        %1170 = vmatpush1.msra.mxu0 0.0
        %1171 = vmatprep.subr.mxu0 0.0
        %1172 = vmatpush1.msra.mxu0 0.0
        %1173 = vmatprep.subr.mxu0 0.0
        %1174 = vmatpush1.msra.mxu0 0.0
        %1175 = vmatprep.subr.mxu0 0.0
        %1176 = vmatpush1.msra.mxu0 0.0
        %1177 = vmatprep.subr.mxu0 0.0
        %1178 = vmatpush1.msra.mxu0 0.0
        %1179 = vmatprep.subr.mxu0 0.0
        %1180 = vmatpush1.msra.mxu0 0.0
        %1181 = vmatprep.subr.mxu0 0.0
        %1182 = vmatpush1.msra.mxu0 0.0
        %1183 = vmatprep.subr.mxu0 0.0
        %1184 = vmatpush1.msra.mxu0 0.0
        %1185 = vmatprep.subr.mxu0 0.0
        %1186 = vmatpush1.msra.mxu0 0.0
        %1187 = vmatprep.subr.mxu0 0.0
        %1188 = vmatpush1.msra.mxu0 0.0
        %1189 = vmatprep.subr.mxu0 0.0
        %1190 = vmatpush1.msra.mxu0 0.0
        %1191 = vmatprep.subr.mxu0 0.0
        %1192 = vmatpush1.msra.mxu0 0.0
        %1193 = vmatprep.subr.mxu0 0.0
        %1194 = vmatpush1.msra.mxu0 0.0
        %1195 = vmatprep.subr.mxu0 0.0
        %1196 = vmatpush1.msra.mxu0 0.0
        %1197 = vmatprep.subr.mxu0 0.0
        %1198 = vmatpush1.msra.mxu0 0.0
        %1199 = vmatprep.subr.mxu0 0.0
        %1200 = vmatpush1.msra.mxu0 0.0
        %1201 = vmatprep.subr.mxu0 0.0
        %1202 = vmatpush1.msra.mxu0 0.0
        %1203 = vmatprep.subr.mxu0 0.0
        %1204 = vmatpush1.msra.mxu0 0.0
        %1205 = vmatprep.mubr.f32.mxu0 0.0
        %1206 = vmatmul.mubr.f32.gmra.mrb[0].mxu0 %v961
        %v1207 = vpop.f32.mrb[0].mxu0
        %v1208 = vadd.f32 %v1073, %v1207
        %v1209 = vpop.f32.mrb[0].mxu0
        %1210 = vmatprep.mubr.f32.mxu0 0.0
        %1211 = vmatmul.mubr.f32.gmra.mrb[0].mxu0 %v964
        %v1212 = vpop.f32.mrb[0].mxu0
        %v1213 = vadd.f32 %v1078, %v1212
        %v1214 = vpop.f32.mrb[0].mxu0
        %1215 = vmatprep.mubr.f32.mxu0 0.0
        %1216 = vmatmul.mubr.f32.gmra.mrb[0].mxu0 %v967
        %v1217 = vpop.f32.mrb[0].mxu0
        %v1218 = vadd.f32 %v1083, %v1217
        %v1219 = vpop.f32.mrb[0].mxu0
        %1220 = vmatprep.mubr.f32.mxu0 0.0
        %1221 = vmatmul.mubr.f32.gmra.mrb[0].mxu0 %v970
        %v1222 = vpop.f32.mrb[0].mxu0
        %v1223 = vadd.f32 %v1088, %v1222
        %v1224 = vpop.f32.mrb[0].mxu0
        %1225 = vmatprep.mubr.f32.mxu0 0.0
        %1226 = vmatmul.mubr.f32.gmra.mrb[0].mxu0 %v973
        %v1227 = vpop.f32.mrb[0].mxu0
        %v1228 = vadd.f32 %v1093, %v1227
        %v1229 = vpop.f32.mrb[0].mxu0
        %1230 = vmatprep.mubr.f32.mxu0 0.0
        %1231 = vmatmul.mubr.f32.gmra.mrb[0].mxu0 %v976
        %v1232 = vpop.f32.mrb[0].mxu0
        %v1233 = vadd.f32 %v1098, %v1232
        %v1234 = vpop.f32.mrb[0].mxu0
        %1235 = vmatprep.mubr.f32.mxu0 0.0
        %1236 = vmatmul.mubr.f32.gmra.mrb[0].mxu0 %v979
        %v1237 = vpop.f32.mrb[0].mxu0
        %v1238 = vadd.f32 %v1103, %v1237
        %v1239 = vpop.f32.mrb[0].mxu0
        %1240 = vmatprep.mubr.f32.mxu0 0.0
        %1241 = vmatmul.mubr.f32.gmra.mrb[0].mxu0 %v982
        %v1242 = vpop.f32.mrb[0].mxu0
        %v1243 = vadd.f32 %v1108, %v1242
        %v1244 = vpop.f32.mrb[0].mxu0
        %1245 = vmatprep.mubr.f32.mxu0 0.0
        %1246 = vmatmul.mubr.f32.gmra.mrb[0].mxu0 %v985
        %v1247 = vpop.f32.mrb[0].mxu0
        %v1248 = vadd.f32 %v1113, %v1247
        %v1249 = vpop.f32.mrb[0].mxu0
        %1250 = vmatprep.mubr.f32.mxu0 0.0
        %1251 = vmatmul.mubr.f32.gmra.mrb[0].mxu0 %v988
        %v1252 = vpop.f32.mrb[0].mxu0
        %v1253 = vadd.f32 %v1118, %v1252
        %v1254 = vpop.f32.mrb[0].mxu0
        %1255 = vmatprep.mubr.f32.mxu0 0.0
        %1256 = vmatmul.mubr.f32.gmra.mrb[0].mxu0 %v991
        %v1257 = vpop.f32.mrb[0].mxu0
        %v1258 = vadd.f32 %v1123, %v1257
        %v1259 = vpop.f32.mrb[0].mxu0
        %1260 = vmatprep.mubr.f32.mxu0 0.0
        %1261 = vmatmul.mubr.f32.gmra.mrb[0].mxu0 %v994
        %v1262 = vpop.f32.mrb[0].mxu0
        %v1263 = vadd.f32 %v1128, %v1262
        %v1264 = vpop.f32.mrb[0].mxu0
        %1265 = vmatprep.mubr.f32.mxu0 0.0
        %1266 = vmatmul.mubr.f32.gmra.mrb[0].mxu0 %v997
        %v1267 = vpop.f32.mrb[0].mxu0
        %v1268 = vadd.f32 %v1133, %v1267
        %v1269 = vpop.f32.mrb[0].mxu0
        %1270 = vmatprep.mubr.f32.mxu0 0.0
        %1271 = vmatmul.mubr.f32.gmra.mrb[0].mxu0 %v1000
        %v1272 = vpop.f32.mrb[0].mxu0
        %v1273 = vadd.f32 %v1138, %v1272
        %v1274 = vpop.f32.mrb[0].mxu0
        %1275 = vdwg.mxu0
        %v1276 = vmax.f32 %v1208, 0.0
        %v1277 = vmax.f32 %v1213, 0.0
        %v1278 = vmax.f32 %v1218, 0.0
        %v1279 = vmax.f32 %v1223, 0.0
        %v1280 = vmax.f32 %v1228, 0.0
        %v1281 = vmax.f32 %v1233, 0.0
        %v1282 = vmax.f32 %v1238, 0.0
        %v1283 = vmax.f32 %v1243, 0.0
        %v1284 = vmax.f32 %v1248, 0.0
        %v1285 = vmax.f32 %v1253, 0.0
        %v1286 = vmax.f32 %v1258, 0.0
        %v1287 = vmax.f32 %v1263, 0.0
        %v1288 = vmax.f32 %v1268, 0.0
        %v1289 = vmax.f32 %v1273, 0.0
        %v1290 = vmax.f32 %v1276, %v1277
        %1292 = vrot.lane.b32.xlu0 %v1290, 64
        %v1293 = vpop.permute.xlu0 %1292
        %v1295 = vmax.f32 %v1290, %v1293
        %1297 = vrot.lane.b32.xlu0 %v1295, 6
        %v1298 = vpop.permute.xlu0 %1297
        %s1300 = scalar_lea.vmem [#allocation3], 24
        %vm1301 = vcmask 392240
        %1302 = vst.msk [vmem:[%s1300] sm:$0xff] %vm1301, %v1298
        %1303 = vrot.lane.b32.xlu0 %v1295, 60
        %v1304 = vpop.permute.xlu0 %1303
        %vm1306 = vcmask 835040
        %1307 = vst.msk [vmem:[#allocation3] sm:$0xff] %vm1306, %v1304
        %v1308 = vmax.f32 %v1278, %v1279
        %1310 = vrot.lane.b32.xlu0 %v1308, 64
        %v1311 = vpop.permute.xlu0 %1310
        %v1313 = vmax.f32 %v1308, %v1311
        %1315 = vrot.lane.b32.xlu0 %v1313, 6
        %v1316 = vpop.permute.xlu0 %1315
        %s1318 = scalar_lea.vmem [#allocation3], 48
        %1319 = vst.msk [vmem:[%s1318] sm:$0xff] %vm1301, %v1316
        %1320 = vrot.lane.b32.xlu0 %v1313, 60
        %v1321 = vpop.permute.xlu0 %1320
        %1323 = vst.msk [vmem:[%s1300] sm:$0xff] %vm1306, %v1321
        %1324 = vrot.lane.b32.xlu0 %v1313, 114
        %v1325 = vpop.permute.xlu0 %1324
        %vm1327 = vcmask 1048464
        %1328 = vst.msk [vmem:[#allocation3] sm:$0xff] %vm1327, %v1325
        %vm1329 = vcmask 228352
        %1330 = vst.msk [vmem:[#allocation3 + $0x8] sm:$0xff] %vm1329, %v1325
        %v1331 = vmax.f32 %v1280, %v1281
        %1333 = vrot.lane.b32.xlu0 %v1331, 64
        %v1334 = vpop.permute.xlu0 %1333
        %v1336 = vmax.f32 %v1331, %v1334
        %1338 = vrot.lane.b32.xlu0 %v1336, 6
        %v1339 = vpop.permute.xlu0 %1338
        %s1341 = scalar_lea.vmem [#allocation3], 72
        %1342 = vst.msk [vmem:[%s1341] sm:$0xff] %vm1301, %v1339
        %1343 = vrot.lane.b32.xlu0 %v1336, 60
        %v1344 = vpop.permute.xlu0 %1343
        %1346 = vst.msk [vmem:[%s1318] sm:$0xff] %vm1306, %v1344
        %1347 = vrot.lane.b32.xlu0 %v1336, 114
        %v1348 = vpop.permute.xlu0 %1347
        %1350 = vst.msk [vmem:[%s1300] sm:$0xff] %vm1327, %v1348
        %1351 = vst.msk [vmem:[%s1300 + $0x8] sm:$0xff] %vm1329, %v1348
        %1352 = vrot.lane.b32.xlu0 %v1336, 40
        %v1353 = vpop.permute.xlu0 %1352
        %vm1355 = vcmask 671040
        %1356 = vst.msk [vmem:[#allocation3 + $0x8] sm:$0xff] %vm1355, %v1353
        %v1357 = vmax.f32 %v1282, %v1283
        %1359 = vrot.lane.b32.xlu0 %v1357, 64
        %v1360 = vpop.permute.xlu0 %1359
        %v1362 = vmax.f32 %v1357, %v1360
        %1364 = vrot.lane.b32.xlu0 %v1362, 6
        %v1365 = vpop.permute.xlu0 %1364
        %s1367 = scalar_lea.vmem [#allocation3], 96
        %1368 = vst.msk [vmem:[%s1367] sm:$0xff] %vm1301, %v1365
        %1369 = vrot.lane.b32.xlu0 %v1362, 60
        %v1370 = vpop.permute.xlu0 %1369
        %1372 = vst.msk [vmem:[%s1341] sm:$0xff] %vm1306, %v1370
        %1373 = vrot.lane.b32.xlu0 %v1362, 114
        %v1374 = vpop.permute.xlu0 %1373
        %1376 = vst.msk [vmem:[%s1318] sm:$0xff] %vm1327, %v1374
        %1377 = vst.msk [vmem:[%s1318 + $0x8] sm:$0xff] %vm1329, %v1374
        %1378 = vrot.lane.b32.xlu0 %v1362, 40
        %v1379 = vpop.permute.xlu0 %1378
        %1381 = vst.msk [vmem:[%s1300 + $0x8] sm:$0xff] %vm1355, %v1379
        %1382 = vrot.lane.b32.xlu0 %v1362, 94
        %v1383 = vpop.permute.xlu0 %1382
        %vm1385 = vcmask 1048304
        %1386 = vst.msk [vmem:[#allocation3 + $0x8] sm:$0xff] %vm1385, %v1383
        %vm1387 = vcmask 64512
        %1388 = vst.msk [vmem:[#allocation3 + $0x10] sm:$0xff] %vm1387, %v1383
        %v1389 = vmax.f32 %v1284, %v1285
        %1391 = vrot.lane.b32.xlu0 %v1389, 64
        %v1392 = vpop.permute.xlu0 %1391
        %v1394 = vmax.f32 %v1389, %v1392
        %1396 = vrot.lane.b32.xlu0 %v1394, 60
        %v1397 = vpop.permute.xlu0 %1396
        %1399 = vst.msk [vmem:[%s1367] sm:$0xff] %vm1306, %v1397
        %1400 = vrot.lane.b32.xlu0 %v1394, 114
        %v1401 = vpop.permute.xlu0 %1400
        %1403 = vst.msk [vmem:[%s1341] sm:$0xff] %vm1327, %v1401
        %1404 = vst.msk [vmem:[%s1341 + $0x8] sm:$0xff] %vm1329, %v1401
        %1405 = vrot.lane.b32.xlu0 %v1394, 40
        %v1406 = vpop.permute.xlu0 %1405
        %1408 = vst.msk [vmem:[%s1318 + $0x8] sm:$0xff] %vm1355, %v1406
        %1409 = vrot.lane.b32.xlu0 %v1394, 94
        %v1410 = vpop.permute.xlu0 %1409
        %1412 = vst.msk [vmem:[%s1300 + $0x8] sm:$0xff] %vm1385, %v1410
        %1413 = vst.msk [vmem:[%s1300 + $0x10] sm:$0xff] %vm1387, %v1410
        %v1414 = vmax.f32 %v1286, %v1287
        %1416 = vrot.lane.b32.xlu0 %v1414, 64
        %v1417 = vpop.permute.xlu0 %1416
        %v1419 = vmax.f32 %v1414, %v1417
        %1421 = vrot.lane.b32.xlu0 %v1419, 114
        %v1422 = vpop.permute.xlu0 %1421
        %1424 = vst.msk [vmem:[%s1367] sm:$0xff] %vm1327, %v1422
        %1425 = vst.msk [vmem:[%s1367 + $0x8] sm:$0xff] %vm1329, %v1422
        %1426 = vrot.lane.b32.xlu0 %v1419, 40
        %v1427 = vpop.permute.xlu0 %1426
        %1429 = vst.msk [vmem:[%s1341 + $0x8] sm:$0xff] %vm1355, %v1427
        %1430 = vrot.lane.b32.xlu0 %v1419, 94
        %v1431 = vpop.permute.xlu0 %1430
        %1433 = vst.msk [vmem:[%s1318 + $0x8] sm:$0xff] %vm1385, %v1431
        %1434 = vst.msk [vmem:[%s1318 + $0x10] sm:$0xff] %vm1387, %v1431
        %v1435 = vmax.f32 %v1288, %v1289
        %1437 = vrot.lane.b32.xlu0 %v1435, 64
        %v1438 = vpop.permute.xlu0 %1437
        %v1440 = vmax.f32 %v1435, %v1438
        %1442 = vrot.lane.b32.xlu0 %v1440, 40
        %v1443 = vpop.permute.xlu0 %1442
        %1445 = vst.msk [vmem:[%s1367 + $0x8] sm:$0xff] %vm1355, %v1443
        %1446 = vrot.lane.b32.xlu0 %v1440, 94
        %v1447 = vpop.permute.xlu0 %1446
        %1449 = vst.msk [vmem:[%s1341 + $0x8] sm:$0xff] %vm1385, %v1447
        %1450 = vst.msk [vmem:[%s1341 + $0x10] sm:$0xff] %vm1387, %v1447
        %v1451 = vld [vmem:[#allocation3] sm:$0xff]
        %v1452 = vld [vmem:[#allocation3 + $0x8] sm:$0xff]
        %v1453 = vld [vmem:[#allocation3 + $0x10] sm:$0xff]
        %v1454 = vld [vmem:[#allocation3 + $0x18] sm:$0xff]
        %v1455 = vld [vmem:[#allocation3 + $0x20] sm:$0xff]
        %v1456 = vld [vmem:[#allocation3 + $0x28] sm:$0xff]
        %v1457 = vld [vmem:[#allocation3 + $0x30] sm:$0xff]
        %v1458 = vld [vmem:[#allocation3 + $0x38] sm:$0xff]
        %v1459 = vld [vmem:[#allocation3 + $0x40] sm:$0xff]
        %v1460 = vld [vmem:[#allocation3 + $0x48] sm:$0xff]
        %v1461 = vld [vmem:[#allocation3 + $0x50] sm:$0xff]
        %v1462 = vld [vmem:[#allocation3 + $0x58] sm:$0xff]
        %v1463 = vld [vmem:[#allocation3 + $0x60] sm:$0xff]
        %v1464 = vld [vmem:[#allocation3 + $0x68] sm:$0xff]
        %v1465 = vld [vmem:[#allocation3 + $0x70] sm:$0xff]
        %v1466 = vld [vmem:[%s3] sm:$0xff]
        %v1467 = vld [vmem:[%s3 + $0x8] sm:$0xff]
        %v1468 = vld [vmem:[%s3 + $0x10] sm:$0xff]
        %v1469 = vld [vmem:[%s3 + $0x18] sm:$0xff]
        %v1470 = vld [vmem:[%s3 + $0x20] sm:$0xff]
        %v1471 = vld [vmem:[%s3 + $0x28] sm:$0xff]
        %v1472 = vld [vmem:[%s3 + $0x30] sm:$0xff]
        %v1473 = vld [vmem:[%s3 + $0x38] sm:$0xff]
        %v1474 = vld [vmem:[%s3 + $0x40] sm:$0xff]
        %v1475 = vld [vmem:[%s3 + $0x48] sm:$0xff]
        %v1476 = vld [vmem:[%s3 + $0x50] sm:$0xff]
        %v1477 = vld [vmem:[%s3 + $0x58] sm:$0xff]
        %v1478 = vld [vmem:[%s3 + $0x60] sm:$0xff]
        %v1479 = vld [vmem:[%s3 + $0x68] sm:$0xff]
        %v1480 = vld [vmem:[%s3 + $0x70] sm:$0xff]
        %v1481 = vld [vmem:[%s3 + $0x78] sm:$0xff]
        %v1482 = vld [vmem:[%s3 + $0x80] sm:$0xff]
        %v1483 = vld [vmem:[%s3 + $0x88] sm:$0xff]
        %v1484 = vld [vmem:[%s3 + $0x90] sm:$0xff]
        %v1485 = vld [vmem:[%s3 + $0x98] sm:$0xff]
        %v1486 = vld [vmem:[%s3 + $0xa0] sm:$0xff]
        %v1487 = vld [vmem:[%s3 + $0xa8] sm:$0xff]
        %v1488 = vld [vmem:[%s3 + $0xb0] sm:$0xff]
        %v1489 = vld [vmem:[%s3 + $0xb8] sm:$0xff]
        %v1490 = vld [vmem:[%s3 + $0xc0] sm:$0xff]
        %v1491 = vld [vmem:[%s3 + $0xc8] sm:$0xff]
        %v1492 = vld [vmem:[%s3 + $0xd0] sm:$0xff]
        %v1493 = vld [vmem:[%s3 + $0xd8] sm:$0xff]
        %v1494 = vld [vmem:[%s3 + $0xe0] sm:$0xff]
        %v1495 = vld [vmem:[%s3 + $0xe8] sm:$0xff]
        %v1496 = vld [vmem:[%s3 + $0xf0] sm:$0xff]
        %v1497 = vld [vmem:[%s3 + $0xf8] sm:$0xff]
        %v1498 = vld [vmem:[%s3 + $0x100] sm:$0xff]
        %v1499 = vld [vmem:[%s3 + $0x108] sm:$0x3f]
        %v1500 = vld [vmem:[%s4] sm:$0x1]
        %v1502 = vlaneseq
        %v1503 = vshrl.u32 %v1502, 7
        %v1504 = vsub.s32 0, %v1503
        %v1505 = vrot.slane %v1500, %v1504
        %v1508 = vsel %vm481, %v1453, 0
        %v1511 = vsel %vm481, %v1456, 0
        %v1514 = vsel %vm481, %v1459, 0
        %v1517 = vsel %vm481, %v1462, 0
        %v1520 = vsel %vm481, %v1465, 0
        %v1523 = vsel %vm1002, %v1499, 0
        %1525 = vmatprep.subr.mxu0 0.0
        %1526 = vmatpush1.msra.mxu0 %v1466
        %1527 = vmatprep.subr.mxu0 0.0
        %1528 = vmatpush1.msra.mxu0 %v1467
        %1529 = vmatprep.subr.mxu0 0.0
        %1530 = vmatpush1.msra.mxu0 %v1468
        %1531 = vmatprep.subr.mxu0 0.0
        %1532 = vmatpush1.msra.mxu0 %v1469
        %1533 = vmatprep.subr.mxu0 0.0
        %1534 = vmatpush1.msra.mxu0 %v1470
        %1535 = vmatprep.subr.mxu0 0.0
        %1536 = vmatpush1.msra.mxu0 %v1471
        %1537 = vmatprep.subr.mxu0 0.0
        %1538 = vmatpush1.msra.mxu0 %v1472
        %1539 = vmatprep.subr.mxu0 0.0
        %1540 = vmatpush1.msra.mxu0 %v1473
        %1541 = vmatprep.subr.mxu0 0.0
        %1542 = vmatpush1.msra.mxu0 %v1474
        %1543 = vmatprep.subr.mxu0 0.0
        %1544 = vmatpush1.msra.mxu0 %v1475
        %1545 = vmatprep.subr.mxu0 0.0
        %1546 = vmatpush1.msra.mxu0 %v1476
        %1547 = vmatprep.subr.mxu0 0.0
        %1548 = vmatpush1.msra.mxu0 %v1477
        %1549 = vmatprep.subr.mxu0 0.0
        %1550 = vmatpush1.msra.mxu0 %v1478
        %1551 = vmatprep.subr.mxu0 0.0
        %1552 = vmatpush1.msra.mxu0 %v1479
        %1553 = vmatprep.subr.mxu0 0.0
        %1554 = vmatpush1.msra.mxu0 %v1480
        %1555 = vmatprep.subr.mxu0 0.0
        %1556 = vmatpush1.msra.mxu0 %v1481
        %1557 = vmatprep.subr.mxu0 0.0
        %1558 = vmatpush1.msra.mxu0 %v1482
        %1559 = vmatprep.subr.mxu0 0.0
        %1560 = vmatpush1.msra.mxu0 %v1483
        %1561 = vmatprep.subr.mxu0 0.0
        %1562 = vmatpush1.msra.mxu0 %v1484
        %1563 = vmatprep.subr.mxu0 0.0
        %1564 = vmatpush1.msra.mxu0 %v1485
        %1565 = vmatprep.subr.mxu0 0.0
        %1566 = vmatpush1.msra.mxu0 %v1486
        %1567 = vmatprep.subr.mxu0 0.0
        %1568 = vmatpush1.msra.mxu0 %v1487
        %1569 = vmatprep.subr.mxu0 0.0
        %1570 = vmatpush1.msra.mxu0 %v1488
        %1571 = vmatprep.subr.mxu0 0.0
        %1572 = vmatpush1.msra.mxu0 %v1489
        %1573 = vmatprep.subr.mxu0 0.0
        %1574 = vmatpush1.msra.mxu0 %v1490
        %1575 = vmatprep.subr.mxu0 0.0
        %1576 = vmatpush1.msra.mxu0 %v1491
        %1577 = vmatprep.subr.mxu0 0.0
        %1578 = vmatpush1.msra.mxu0 %v1492
        %1579 = vmatprep.subr.mxu0 0.0
        %1580 = vmatpush1.msra.mxu0 %v1493
        %1581 = vmatprep.subr.mxu0 0.0
        %1582 = vmatpush1.msra.mxu0 %v1494
        %1583 = vmatprep.subr.mxu0 0.0
        %1584 = vmatpush1.msra.mxu0 %v1495
        %1585 = vmatprep.subr.mxu0 0.0
        %1586 = vmatpush1.msra.mxu0 %v1496
        %1587 = vmatprep.subr.mxu0 0.0
        %1588 = vmatpush1.msra.mxu0 %v1497
        %1589 = vmatprep.mubr.f32.mxu0 %v1452
        %1590 = vmatmul.mubr.f32.gmra.mrb[0].mxu0 %v1451
        %v1591 = vpop.f32.mrb[0].mxu0
        %v1592 = vadd.f32 %v1505, %v1591
        %v1593 = vpop.f32.mrb[0].mxu0
        %1594 = vmatprep.mubr.f32.mxu0 %v1455
        %1595 = vmatmul.mubr.f32.gmra.mrb[0].mxu0 %v1454
        %v1596 = vpop.f32.mrb[0].mxu0
        %v1597 = vadd.f32 %v1505, %v1596
        %v1598 = vpop.f32.mrb[0].mxu0
        %1599 = vmatprep.mubr.f32.mxu0 %v1458
        %1600 = vmatmul.mubr.f32.gmra.mrb[0].mxu0 %v1457
        %v1601 = vpop.f32.mrb[0].mxu0
        %v1602 = vadd.f32 %v1505, %v1601
        %v1603 = vpop.f32.mrb[0].mxu0
        %1604 = vmatprep.mubr.f32.mxu0 %v1461
        %1605 = vmatmul.mubr.f32.gmra.mrb[0].mxu0 %v1460
        %v1606 = vpop.f32.mrb[0].mxu0
        %v1607 = vadd.f32 %v1505, %v1606
        %v1608 = vpop.f32.mrb[0].mxu0
        %1609 = vmatprep.mubr.f32.mxu0 %v1464
        %1610 = vmatmul.mubr.f32.gmra.mrb[0].mxu0 %v1463
        %v1611 = vpop.f32.mrb[0].mxu0
        %v1612 = vpop.f32.mrb[0].mxu0
        %1613 = vdwg.mxu0
        %1614 = vmatprep.subr.mxu0 0.0
        %1615 = vmatpush1.msra.mxu0 %v1498
        %1616 = vmatprep.subr.mxu0 0.0
        %1617 = vmatpush1.msra.mxu0 %v1523
        %1618 = vmatprep.subr.mxu0 0.0
        %1619 = vmatpush1.msra.mxu0 0.0
        %1620 = vmatprep.subr.mxu0 0.0
        %1621 = vmatpush1.msra.mxu0 0.0
        %1622 = vmatprep.subr.mxu0 0.0
        %1623 = vmatpush1.msra.mxu0 0.0
        %1624 = vmatprep.subr.mxu0 0.0
        %1625 = vmatpush1.msra.mxu0 0.0
        %1626 = vmatprep.subr.mxu0 0.0
        %1627 = vmatpush1.msra.mxu0 0.0
        %1628 = vmatprep.subr.mxu0 0.0
        %1629 = vmatpush1.msra.mxu0 0.0
        %1630 = vmatprep.subr.mxu0 0.0
        %1631 = vmatpush1.msra.mxu0 0.0
        %1632 = vmatprep.subr.mxu0 0.0
        %1633 = vmatpush1.msra.mxu0 0.0
        %1634 = vmatprep.subr.mxu0 0.0
        %1635 = vmatpush1.msra.mxu0 0.0
        %1636 = vmatprep.subr.mxu0 0.0
        %1637 = vmatpush1.msra.mxu0 0.0
        %1638 = vmatprep.subr.mxu0 0.0
        %1639 = vmatpush1.msra.mxu0 0.0
        %1640 = vmatprep.subr.mxu0 0.0
        %1641 = vmatpush1.msra.mxu0 0.0
        %1642 = vmatprep.subr.mxu0 0.0
        %1643 = vmatpush1.msra.mxu0 0.0
        %1644 = vmatprep.subr.mxu0 0.0
        %1645 = vmatpush1.msra.mxu0 0.0
        %1646 = vmatprep.subr.mxu0 0.0
        %1647 = vmatpush1.msra.mxu0 0.0
        %1648 = vmatprep.subr.mxu0 0.0
        %1649 = vmatpush1.msra.mxu0 0.0
        %1650 = vmatprep.subr.mxu0 0.0
        %1651 = vmatpush1.msra.mxu0 0.0
        %1652 = vmatprep.subr.mxu0 0.0
        %1653 = vmatpush1.msra.mxu0 0.0
        %1654 = vmatprep.subr.mxu0 0.0
        %1655 = vmatpush1.msra.mxu0 0.0
        %1656 = vmatprep.subr.mxu0 0.0
        %1657 = vmatpush1.msra.mxu0 0.0
        %1658 = vmatprep.subr.mxu0 0.0
        %1659 = vmatpush1.msra.mxu0 0.0
        %1660 = vmatprep.subr.mxu0 0.0
        %1661 = vmatpush1.msra.mxu0 0.0
        %1662 = vmatprep.subr.mxu0 0.0
        %1663 = vmatpush1.msra.mxu0 0.0
        %1664 = vmatprep.subr.mxu0 0.0
        %1665 = vmatpush1.msra.mxu0 0.0
        %1666 = vmatprep.subr.mxu0 0.0
        %1667 = vmatpush1.msra.mxu0 0.0
        %1668 = vmatprep.subr.mxu0 0.0
        %1669 = vmatpush1.msra.mxu0 0.0
        %1670 = vmatprep.subr.mxu0 0.0
        %1671 = vmatpush1.msra.mxu0 0.0
        %1672 = vmatprep.subr.mxu0 0.0
        %1673 = vmatpush1.msra.mxu0 0.0
        %1674 = vmatprep.subr.mxu0 0.0
        %1675 = vmatpush1.msra.mxu0 0.0
        %1676 = vmatprep.subr.mxu0 0.0
        %1677 = vmatpush1.msra.mxu0 0.0
        %1678 = vmatprep.mubr.f32.mxu0 0.0
        %1679 = vmatmul.mubr.f32.gmra.mrb[0].mxu0 %v1508
        %v1680 = vpop.f32.mrb[0].mxu0
        %v1681 = vadd.f32 %v1592, %v1680
        %v1682 = vpop.f32.mrb[0].mxu0
        %1683 = vmatprep.mubr.f32.mxu0 0.0
        %1684 = vmatmul.mubr.f32.gmra.mrb[0].mxu0 %v1511
        %v1685 = vpop.f32.mrb[0].mxu0
        %v1686 = vadd.f32 %v1597, %v1685
        %v1687 = vpop.f32.mrb[0].mxu0
        %1688 = vmatprep.mubr.f32.mxu0 0.0
        %1689 = vmatmul.mubr.f32.gmra.mrb[0].mxu0 %v1514
        %v1690 = vpop.f32.mrb[0].mxu0
        %v1691 = vadd.f32 %v1602, %v1690
        %v1692 = vpop.f32.mrb[0].mxu0
        %1693 = vmatprep.mubr.f32.mxu0 0.0
        %1694 = vmatmul.mubr.f32.gmra.mrb[0].mxu0 %v1517
        %v1695 = vpop.f32.mrb[0].mxu0
        %v1696 = vadd.f32 %v1607, %v1695
        %v1697 = vpop.f32.mrb[0].mxu0
        %1698 = vmatprep.mubr.f32.mxu0 0.0
        %1699 = vmatmul.mubr.f32.gmra.mrb[0].mxu0 %v1520
        %v1700 = vpop.f32.mrb[0].mxu0
        %v1701 = vpop.f32.mrb[0].mxu0
        %1702 = vdwg.mxu0
        %v1703 = vmax.f32 %v1681, 0.0
        %v1704 = vmax.f32 %v1686, 0.0
        %v1705 = vmax.f32 %v1691, 0.0
        %v1706 = vmax.f32 %v1696, 0.0
        %v1707 = vmax.f32 %v1703, %v1704
        %1709 = vrot.lane.b32.xlu0 %v1707, 64
        %v1710 = vpop.permute.xlu0 %1709
        %v1712 = vmax.f32 %v1707, %v1710
        %vm1713 = vcmask 261120
        %1714 = vst.msk [vmem:[#allocation4] sm:$0xff] %vm1713, %v1712
        %v1715 = vmax.f32 %v1705, %v1706
        %1717 = vrot.lane.b32.xlu0 %v1715, 64
        %v1718 = vpop.permute.xlu0 %1717
        %v1720 = vmax.f32 %v1715, %v1718
        %1722 = vrot.lane.b32.xlu0 %v1720, 32
        %v1723 = vpop.permute.xlu0 %1722
        %vm1725 = vcmask 523520
        %1726 = vst.msk [vmem:[#allocation4] sm:$0xff] %vm1725, %v1723
        %v1727 = vld [vmem:[#allocation4] sm:$0xff]
        %v1728 = vld [vmem:[%s5] sm:$0xff]
        %v1729 = vld [vmem:[%s5 + $0x8] sm:$0xff]
        %v1730 = vld [vmem:[%s5 + $0x10] sm:$0xff]
        %v1731 = vld [vmem:[%s5 + $0x18] sm:$0xff]
        %v1732 = vld [vmem:[%s5 + $0x20] sm:$0xff]
        %v1733 = vld [vmem:[%s5 + $0x28] sm:$0xff]
        %v1734 = vld [vmem:[%s5 + $0x30] sm:$0xff]
        %v1735 = vld [vmem:[%s5 + $0x38] sm:$0xff]
        %v1736 = vld [vmem:[%s5 + $0x40] sm:$0xff]
        %v1737 = vld [vmem:[%s5 + $0x48] sm:$0xff]
        %v1738 = vld [vmem:[%s5 + $0x50] sm:$0xff]
        %v1739 = vld [vmem:[%s5 + $0x58] sm:$0xff]
        %v1740 = vld [vmem:[%s5 + $0x60] sm:$0xff]
        %v1741 = vld [vmem:[%s5 + $0x68] sm:$0xff]
        %v1742 = vld [vmem:[%s5 + $0x70] sm:$0xff]
        %v1743 = vld [vmem:[%s5 + $0x78] sm:$0xff]
        %v1744 = vld [vmem:[%s6] sm:$0x1]
        %v1746 = vlaneseq
        %v1747 = vshrl.u32 %v1746, 7
        %v1748 = vsub.s32 0, %v1747
        %v1749 = vrot.slane %v1744, %v1748
        %1751 = vmatprep.subr.mxu0 0.0
        %1752 = vmatpush1.msra.mxu0 %v1728
        %1753 = vmatprep.subr.mxu0 0.0
        %1754 = vmatpush1.msra.mxu0 %v1729
        %1755 = vmatprep.subr.mxu0 0.0
        %1756 = vmatpush1.msra.mxu0 %v1730
        %1757 = vmatprep.subr.mxu0 0.0
        %1758 = vmatpush1.msra.mxu0 %v1731
        %1759 = vmatprep.subr.mxu0 0.0
        %1760 = vmatpush1.msra.mxu0 %v1732
        %1761 = vmatprep.subr.mxu0 0.0
        %1762 = vmatpush1.msra.mxu0 %v1733
        %1763 = vmatprep.subr.mxu0 0.0
        %1764 = vmatpush1.msra.mxu0 %v1734
        %1765 = vmatprep.subr.mxu0 0.0
        %1766 = vmatpush1.msra.mxu0 %v1735
        %1767 = vmatprep.subr.mxu0 0.0
        %1768 = vmatpush1.msra.mxu0 %v1736
        %1769 = vmatprep.subr.mxu0 0.0
        %1770 = vmatpush1.msra.mxu0 %v1737
        %1771 = vmatprep.subr.mxu0 0.0
        %1772 = vmatpush1.msra.mxu0 %v1738
        %1773 = vmatprep.subr.mxu0 0.0
        %1774 = vmatpush1.msra.mxu0 %v1739
        %1775 = vmatprep.subr.mxu0 0.0
        %1776 = vmatpush1.msra.mxu0 %v1740
        %1777 = vmatprep.subr.mxu0 0.0
        %1778 = vmatpush1.msra.mxu0 %v1741
        %1779 = vmatprep.subr.mxu0 0.0
        %1780 = vmatpush1.msra.mxu0 %v1742
        %1781 = vmatprep.subr.mxu0 0.0
        %1782 = vmatpush1.msra.mxu0 %v1743
        %1783 = vmatprep.subr.mxu0 0.0
        %1784 = vmatpush1.msra.mxu0 0.0
        %1785 = vmatprep.subr.mxu0 0.0
        %1786 = vmatpush1.msra.mxu0 0.0
        %1787 = vmatprep.subr.mxu0 0.0
        %1788 = vmatpush1.msra.mxu0 0.0
        %1789 = vmatprep.subr.mxu0 0.0
        %1790 = vmatpush1.msra.mxu0 0.0
        %1791 = vmatprep.subr.mxu0 0.0
        %1792 = vmatpush1.msra.mxu0 0.0
        %1793 = vmatprep.subr.mxu0 0.0
        %1794 = vmatpush1.msra.mxu0 0.0
        %1795 = vmatprep.subr.mxu0 0.0
        %1796 = vmatpush1.msra.mxu0 0.0
        %1797 = vmatprep.subr.mxu0 0.0
        %1798 = vmatpush1.msra.mxu0 0.0
        %1799 = vmatprep.subr.mxu0 0.0
        %1800 = vmatpush1.msra.mxu0 0.0
        %1801 = vmatprep.subr.mxu0 0.0
        %1802 = vmatpush1.msra.mxu0 0.0
        %1803 = vmatprep.subr.mxu0 0.0
        %1804 = vmatpush1.msra.mxu0 0.0
        %1805 = vmatprep.subr.mxu0 0.0
        %1806 = vmatpush1.msra.mxu0 0.0
        %1807 = vmatprep.subr.mxu0 0.0
        %1808 = vmatpush1.msra.mxu0 0.0
        %1809 = vmatprep.subr.mxu0 0.0
        %1810 = vmatpush1.msra.mxu0 0.0
        %1811 = vmatprep.subr.mxu0 0.0
        %1812 = vmatpush1.msra.mxu0 0.0
        %1813 = vmatprep.subr.mxu0 0.0
        %1814 = vmatpush1.msra.mxu0 0.0
        %1815 = vmatprep.mubr.f32.mxu0 0.0
        %1816 = vmatmul.mubr.f32.gmra.mrb[0].mxu0 %v1727
        %v1817 = vpop.f32.mrb[0].mxu0
        %v1818 = vadd.f32 %v1749, %v1817
        %v1819 = vpop.f32.mrb[0].mxu0
        %1820 = vdwg.mxu0
        %v1821 = vmax.f32 %v1818, 0.0
        %v1822 = vld [vmem:[%s7] sm:$0xff]
        %v1823 = vld [vmem:[%s7 + $0x8] sm:$0xff]
        %v1824 = vld [vmem:[%s7 + $0x10] sm:$0xff]
        %v1825 = vld [vmem:[%s7 + $0x18] sm:$0xff]
        %v1826 = vld [vmem:[%s7 + $0x20] sm:$0xff]
        %v1827 = vld [vmem:[%s7 + $0x28] sm:$0xff]
        %v1828 = vld [vmem:[%s7 + $0x30] sm:$0xff]
        %v1829 = vld [vmem:[%s7 + $0x38] sm:$0xff]
        %v1830 = vld [vmem:[%s7 + $0x40] sm:$0xff]
        %v1831 = vld [vmem:[%s7 + $0x48] sm:$0xff]
        %v1832 = vld [vmem:[%s7 + $0x50] sm:$0xff]
        %v1833 = vld [vmem:[%s7 + $0x58] sm:$0xff]
        %v1834 = vld [vmem:[%s7 + $0x60] sm:$0xff]
        %v1835 = vld [vmem:[%s7 + $0x68] sm:$0xff]
        %v1836 = vld [vmem:[%s7 + $0x70] sm:$0xff]
        %v1837 = vld [vmem:[%s7 + $0x78] sm:$0xff]
        %v1838 = vld [vmem:[%s8] sm:$0x1]
        %v1840 = vlaneseq
        %v1841 = vshrl.u32 %v1840, 7
        %v1842 = vsub.s32 0, %v1841
        %v1843 = vrot.slane %v1838, %v1842
        %1845 = vmatprep.subr.mxu0 0.0
        %1846 = vmatpush1.msra.mxu0 %v1822
        %1847 = vmatprep.subr.mxu0 0.0
        %1848 = vmatpush1.msra.mxu0 %v1823
        %1849 = vmatprep.subr.mxu0 0.0
        %1850 = vmatpush1.msra.mxu0 %v1824
        %1851 = vmatprep.subr.mxu0 0.0
        %1852 = vmatpush1.msra.mxu0 %v1825
        %1853 = vmatprep.subr.mxu0 0.0
        %1854 = vmatpush1.msra.mxu0 %v1826
        %1855 = vmatprep.subr.mxu0 0.0
        %1856 = vmatpush1.msra.mxu0 %v1827
        %1857 = vmatprep.subr.mxu0 0.0
        %1858 = vmatpush1.msra.mxu0 %v1828
        %1859 = vmatprep.subr.mxu0 0.0
        %1860 = vmatpush1.msra.mxu0 %v1829
        %1861 = vmatprep.subr.mxu0 0.0
        %1862 = vmatpush1.msra.mxu0 %v1830
        %1863 = vmatprep.subr.mxu0 0.0
        %1864 = vmatpush1.msra.mxu0 %v1831
        %1865 = vmatprep.subr.mxu0 0.0
        %1866 = vmatpush1.msra.mxu0 %v1832
        %1867 = vmatprep.subr.mxu0 0.0
        %1868 = vmatpush1.msra.mxu0 %v1833
        %1869 = vmatprep.subr.mxu0 0.0
        %1870 = vmatpush1.msra.mxu0 %v1834
        %1871 = vmatprep.subr.mxu0 0.0
        %1872 = vmatpush1.msra.mxu0 %v1835
        %1873 = vmatprep.subr.mxu0 0.0
        %1874 = vmatpush1.msra.mxu0 %v1836
        %1875 = vmatprep.subr.mxu0 0.0
        %1876 = vmatpush1.msra.mxu0 %v1837
        %1877 = vmatprep.subr.mxu0 0.0
        %1878 = vmatpush1.msra.mxu0 0.0
        %1879 = vmatprep.subr.mxu0 0.0
        %1880 = vmatpush1.msra.mxu0 0.0
        %1881 = vmatprep.subr.mxu0 0.0
        %1882 = vmatpush1.msra.mxu0 0.0
        %1883 = vmatprep.subr.mxu0 0.0
        %1884 = vmatpush1.msra.mxu0 0.0
        %1885 = vmatprep.subr.mxu0 0.0
        %1886 = vmatpush1.msra.mxu0 0.0
        %1887 = vmatprep.subr.mxu0 0.0
        %1888 = vmatpush1.msra.mxu0 0.0
        %1889 = vmatprep.subr.mxu0 0.0
        %1890 = vmatpush1.msra.mxu0 0.0
        %1891 = vmatprep.subr.mxu0 0.0
        %1892 = vmatpush1.msra.mxu0 0.0
        %1893 = vmatprep.subr.mxu0 0.0
        %1894 = vmatpush1.msra.mxu0 0.0
        %1895 = vmatprep.subr.mxu0 0.0
        %1896 = vmatpush1.msra.mxu0 0.0
        %1897 = vmatprep.subr.mxu0 0.0
        %1898 = vmatpush1.msra.mxu0 0.0
        %1899 = vmatprep.subr.mxu0 0.0
        %1900 = vmatpush1.msra.mxu0 0.0
        %1901 = vmatprep.subr.mxu0 0.0
        %1902 = vmatpush1.msra.mxu0 0.0
        %1903 = vmatprep.subr.mxu0 0.0
        %1904 = vmatpush1.msra.mxu0 0.0
        %1905 = vmatprep.subr.mxu0 0.0
        %1906 = vmatpush1.msra.mxu0 0.0
        %1907 = vmatprep.subr.mxu0 0.0
        %1908 = vmatpush1.msra.mxu0 0.0
        %1909 = vmatprep.mubr.f32.mxu0 0.0
        %1910 = vmatmul.mubr.f32.gmra.mrb[0].mxu0 %v1821
        %v1911 = vpop.f32.mrb[0].mxu0
        %v1912 = vadd.f32 %v1843, %v1911
        %v1913 = vpop.f32.mrb[0].mxu0
        %1914 = vdwg.mxu0
        %v1915 = vmax.f32 %v1912, 0.0
        %v1916 = vld [vmem:[%s9] sm:$0xff]
        %v1917 = vld [vmem:[%s9 + $0x8] sm:$0xff]
        %v1918 = vld [vmem:[%s9 + $0x10] sm:$0xff]
        %v1919 = vld [vmem:[%s9 + $0x18] sm:$0xff]
        %v1920 = vld [vmem:[%s9 + $0x20] sm:$0xff]
        %v1921 = vld [vmem:[%s9 + $0x28] sm:$0xff]
        %v1922 = vld [vmem:[%s9 + $0x30] sm:$0xff]
        %v1923 = vld [vmem:[%s9 + $0x38] sm:$0xff]
        %v1924 = vld [vmem:[%s9 + $0x40] sm:$0xff]
        %v1925 = vld [vmem:[%s9 + $0x48] sm:$0xff]
        %v1926 = vld [vmem:[%s9 + $0x50] sm:$0xff]
        %v1927 = vld [vmem:[%s9 + $0x58] sm:$0xff]
        %v1928 = vld [vmem:[%s9 + $0x60] sm:$0xff]
        %v1929 = vld [vmem:[%s9 + $0x68] sm:$0xff]
        %v1930 = vld [vmem:[%s9 + $0x70] sm:$0xff]
        %v1931 = vld [vmem:[%s9 + $0x78] sm:$0xff]
        %v1932 = vld [vmem:[%s10] sm:$0x1]
        %v1934 = vlaneseq
        %v1935 = vshrl.u32 %v1934, 7
        %v1936 = vsub.s32 0, %v1935
        %v1937 = vrot.slane %v1932, %v1936
        %1939 = vmatprep.subr.mxu0 0.0
        %1940 = vmatpush1.msra.mxu0 %v1916
        %1941 = vmatprep.subr.mxu0 0.0
        %1942 = vmatpush1.msra.mxu0 %v1917
        %1943 = vmatprep.subr.mxu0 0.0
        %1944 = vmatpush1.msra.mxu0 %v1918
        %1945 = vmatprep.subr.mxu0 0.0
        %1946 = vmatpush1.msra.mxu0 %v1919
        %1947 = vmatprep.subr.mxu0 0.0
        %1948 = vmatpush1.msra.mxu0 %v1920
        %1949 = vmatprep.subr.mxu0 0.0
        %1950 = vmatpush1.msra.mxu0 %v1921
        %1951 = vmatprep.subr.mxu0 0.0
        %1952 = vmatpush1.msra.mxu0 %v1922
        %1953 = vmatprep.subr.mxu0 0.0
        %1954 = vmatpush1.msra.mxu0 %v1923
        %1955 = vmatprep.subr.mxu0 0.0
        %1956 = vmatpush1.msra.mxu0 %v1924
        %1957 = vmatprep.subr.mxu0 0.0
        %1958 = vmatpush1.msra.mxu0 %v1925
        %1959 = vmatprep.subr.mxu0 0.0
        %1960 = vmatpush1.msra.mxu0 %v1926
        %1961 = vmatprep.subr.mxu0 0.0
        %1962 = vmatpush1.msra.mxu0 %v1927
        %1963 = vmatprep.subr.mxu0 0.0
        %1964 = vmatpush1.msra.mxu0 %v1928
        %1965 = vmatprep.subr.mxu0 0.0
        %1966 = vmatpush1.msra.mxu0 %v1929
        %1967 = vmatprep.subr.mxu0 0.0
        %1968 = vmatpush1.msra.mxu0 %v1930
        %1969 = vmatprep.subr.mxu0 0.0
        %1970 = vmatpush1.msra.mxu0 %v1931
        %1971 = vmatprep.subr.mxu0 0.0
        %1972 = vmatpush1.msra.mxu0 0.0
        %1973 = vmatprep.subr.mxu0 0.0
        %1974 = vmatpush1.msra.mxu0 0.0
        %1975 = vmatprep.subr.mxu0 0.0
        %1976 = vmatpush1.msra.mxu0 0.0
        %1977 = vmatprep.subr.mxu0 0.0
        %1978 = vmatpush1.msra.mxu0 0.0
        %1979 = vmatprep.subr.mxu0 0.0
        %1980 = vmatpush1.msra.mxu0 0.0
        %1981 = vmatprep.subr.mxu0 0.0
        %1982 = vmatpush1.msra.mxu0 0.0
        %1983 = vmatprep.subr.mxu0 0.0
        %1984 = vmatpush1.msra.mxu0 0.0
        %1985 = vmatprep.subr.mxu0 0.0
        %1986 = vmatpush1.msra.mxu0 0.0
        %1987 = vmatprep.subr.mxu0 0.0
        %1988 = vmatpush1.msra.mxu0 0.0
        %1989 = vmatprep.subr.mxu0 0.0
        %1990 = vmatpush1.msra.mxu0 0.0
        %1991 = vmatprep.subr.mxu0 0.0
        %1992 = vmatpush1.msra.mxu0 0.0
        %1993 = vmatprep.subr.mxu0 0.0
        %1994 = vmatpush1.msra.mxu0 0.0
        %1995 = vmatprep.subr.mxu0 0.0
        %1996 = vmatpush1.msra.mxu0 0.0
        %1997 = vmatprep.subr.mxu0 0.0
        %1998 = vmatpush1.msra.mxu0 0.0
        %1999 = vmatprep.subr.mxu0 0.0
        %2000 = vmatpush1.msra.mxu0 0.0
        %2001 = vmatprep.subr.mxu0 0.0
        %2002 = vmatpush1.msra.mxu0 0.0
        %2003 = vmatprep.mubr.f32.mxu0 0.0
        %2004 = vmatmul.mubr.f32.gmra.mrb[0].mxu0 %v1915
        %v2005 = vpop.f32.mrb[0].mxu0
        %v2006 = vadd.f32 %v1937, %v2005
        %v2007 = vpop.f32.mrb[0].mxu0
        %2008 = vdwg.mxu0
        %2009 = vst [vmem:[%s478] sm:$0xff] %v2006
        %p2010 = scmp.lt.s32.totalorder %s22, 2
        %s2011 = scalar_select %p2010, %s22, 2
        %s2012 = smul.addr %s2011, 8
        %s2013 = scalar_lea.vmem %s11, %s2012
        // Predicated region
        $region103: #{forward.1} parent=97 // pred_check
          %p2014 = pneg %p276
        $region104: #{forward.1} parent=97 // pred_check_branch
          %2016 = sbr.rel (%p2014) target = $region106
        $region105: #{forward.1} parent=97 // pred_region
          _
        $region106: #{forward.1} parent=97 // pred_fallthru
          _
      $region98: #{forward.1} parent=5 // pred_fallthru
        _
      %p2017 = scmp.le.s32.totalorder 2, %s17
      // Predicated region
      $region107: #{forward.1} parent=5 // pred_check
        %p2018 = pneg %p2017
      $region108: #{forward.1} parent=5 // pred_check_branch
        %2020 = sbr.rel (%p2018) target = $region110
      $region109: #{forward.1} parent=5 // pred_region
        %s2021 = ssub.s32 %s17, 2
        // Predicated region
        $region111: #{forward.1} parent=109 // pred_check
          %p2022 = pneg %p282
        $region112: #{forward.1} parent=109 // pred_check_branch
          %2024 = sbr.rel (%p2022) target = $region114
        $region113: #{forward.1} parent=109 // pred_region
          %p2025 = scmp.lt.s32.totalorder %s23, 2
          %s2026 = scalar_select %p2025, %s23, 2
          %s2027 = smul.addr %s2026, 8
          %s2028 = scalar_lea.vmem %s11, %s2027
        $region114: #{forward.1} parent=109 // pred_fallthru
          _
      $region110: #{forward.1} parent=5 // pred_fallthru
        _
    $region6: #{forward.1} parent=1 // loop_footer
      %s21 = sadd.s32 1, %s17
    $region7: #{forward.1} parent=1 // loop_footer_branch
      %16 = sbr.rel target = $region3
    $region8: #{forward.1} parent=1 // loop_exit
      _

</llo_original>
